<compile_context>
chip_gen: v7x
topology: tpu7x:2x2x1
jax: 0.10.0
libtpu: 0.0.40
codegen_flags: <defaults>
</compile_context>

<pallas_src>
import jax
import jax.numpy as jnp
from jax import lax
from jax.experimental import pallas as pl
from jax.experimental.pallas import tpu as pltpu


def _round_up(x, m):
    return ((x + m - 1) // m) * m


def _layer_norm(x, gamma, beta, eps=1e-5):
    mu = jnp.mean(x, axis=-1, keepdims=True)
    var = jnp.mean((x - mu) ** 2, axis=-1, keepdims=True)
    return (x - mu) * lax.rsqrt(var + eps) * gamma + beta


def _block_kernel(x_ref,        # (bb, T, D)  embedded inputs for bb sequences (f32)
                  pvec_ref,     # (8, W)      packed small params (f32)
                  wqkv_ref,     # (D, 3D)     fused QKV weights (bf16)
                  w1_ref,       # (D, 4D)     FFN up (bf16)
                  w2_ref,       # (4D, D)     FFN down (bf16)
                  wo_ref,       # (D, O_pad)  output head, lane-padded (bf16)
                  out_ref):     # (bb, O_pad) logits (f32)
    bb, T, D = x_ref.shape
    H = w1_ref.shape[-1]
    o_pad = out_ref.shape[-1]
    mm_dtype = wqkv_ref.dtype
    scale = float(D) ** -0.5          # matches C ** (-0.5) in Head.forward (n_head = 1)

    # Unpack the single small-parameter slab (static sublane/lane slices, no extra DMA).
    ln1g = pvec_ref[0:1, :D]
    ln1b = pvec_ref[1:2, :D]
    ln2g = pvec_ref[2:3, :D]
    ln2b = pvec_ref[3:4, :D]
    b1 = pvec_ref[4:5, :H]
    b2 = pvec_ref[5:6, :D]
    bo = pvec_ref[6:7, :o_pad]

    # Flatten the sequence block into rows: every matmul below sees M = bb*T rows.
    x = x_ref[...].reshape(bb * T, D)                       # f32 residual stream

    # ---- x = x + sa(ln1(x)) --------------------------------------------------
    xn1 = _layer_norm(x, ln1g, ln1b)
    qkv = jnp.dot(xn1.astype(mm_dtype), wqkv_ref[...],
                  preferred_element_type=jnp.float32)       # (M, 3D), single MXU push
    qkv = qkv.reshape(bb, T, 3 * D)
    q = qkv[:, :, :D]
    k = qkv[:, :, D:2 * D]
    v = qkv[:, :, 2 * D:]

    # Per-sequence attention: contract last dims directly (no explicit k transpose).
    s = jnp.einsum('bqd,bkd->bqk', q.astype(mm_dtype), k.astype(mm_dtype),
                   preferred_element_type=jnp.float32) * scale      # (bb, T, T)
    s = s - jnp.max(s, axis=-1, keepdims=True)
    p = jnp.exp(s)
    p = p * pl.reciprocal(jnp.sum(p, axis=-1, keepdims=True), approx=True)
    sa = jnp.einsum('bqk,bkd->bqd', p.astype(mm_dtype), v.astype(mm_dtype),
                    preferred_element_type=jnp.float32)             # (bb, T, D)
    x = x + sa.reshape(bb * T, D)

    # ---- x = x + ffwd(ln2(x)) ------------------------------------------------
    xn2 = _layer_norm(x, ln2g, ln2b)
    h = jnp.dot(xn2.astype(mm_dtype), w1_ref[...],
                preferred_element_type=jnp.float32) + b1
    h = jnp.maximum(h, 0.0)
    ff = jnp.dot(h.astype(mm_dtype), w2_ref[...],
                 preferred_element_type=jnp.float32) + b2
    x = x + ff

    # ---- per-sequence mean over T, then lane-dense output projection ----------
    xm = jnp.mean(x.reshape(bb, T, D), axis=1)                      # (bb, D)
    logits = jnp.dot(xm.astype(mm_dtype), wo_ref[...],
                     preferred_element_type=jnp.float32) + bo       # (bb, O_pad)
    out_ref[...] = logits


def simple_self_attention_forward(token_ids, params, *, block_b=32,
                                  matmul_dtype=jnp.bfloat16):
    """token_ids: (B, T) int32. Returns logits (B, output_size) float32."""
    B, T = token_ids.shape
    emb_table = params["emb_table"]          # (vocab, D)
    pos_table = params["pos_table"]          # (max_length, D)
    D = emb_table.shape[1]
    H = 4 * D
    O = params["wo"].shape[1]
    O_pad = _round_up(max(O, 128), 128)      # lane-dense output width
    W = max(H, O_pad)                        # packed-param slab width

    # Glue (embedding gathers) in plain JAX.
    tok_emb = jnp.take(emb_table, token_ids, axis=0)          # (B, T, D)
    pos_emb = pos_table[:T]                                   # (T, D)
    x_emb = (tok_emb + pos_emb[None]).astype(jnp.float32)     # (B, T, D)

    # Batch-block tiling: each grid step handles bb sequences (bb*T rows on the MXU).
    bb = min(block_b, _round_up(B, 8))
    B_pad = _round_up(B, bb)
    if B_pad != B:
        x_emb = jnp.pad(x_emb, ((0, B_pad - B), (0, 0), (0, 0)))

    # Fused QKV + bf16 MXU operands; output head padded to O_pad lanes.
    wqkv = jnp.concatenate([params["wq"], params["wk"], params["wv"]],
                           axis=1).astype(matmul_dtype)        # (D, 3D)
    w1 = params["w1"].astype(matmul_dtype)                     # (D, 4D)
    w2 = params["w2"].astype(matmul_dtype)                     # (4D, D)
    wo = jnp.pad(params["wo"], ((0, 0), (0, O_pad - O))).astype(matmul_dtype)

    # Pack every small vector parameter into one (8, W) f32 slab (one DMA, not nine).
    def row(v):
        v = jnp.asarray(v, jnp.float32).reshape(1, -1)
        return jnp.pad(v, ((0, 0), (0, W - v.shape[-1])))
    pvec = jnp.concatenate([
        row(params["ln1_gamma"]), row(params["ln1_beta"]),
        row(params["ln2_gamma"]), row(params["ln2_beta"]),
        row(params["b1"]), row(params["b2"]),
        row(jnp.pad(params["bo"], (0, O_pad - O))),
        jnp.zeros((1, W), jnp.float32),
    ], axis=0)                                                 # (8, W)

    def full_spec(a):
        # Grid-invariant operand: same block every step (stays resident in VMEM).
        return pl.BlockSpec(a.shape, lambda b: (0,) * a.ndim)

    grid_spec = pltpu.PrefetchScalarGridSpec(
        num_scalar_prefetch=0,
        grid=(B_pad // bb,),
        in_specs=[
            pl.BlockSpec((bb, T, D), lambda b: (b, 0, 0)),     # embedded inputs per block
            full_spec(pvec), full_spec(wqkv),
            full_spec(w1), full_spec(w2), full_spec(wo),
        ],
        out_specs=pl.BlockSpec((bb, O_pad), lambda b: (b, 0)),
    )

    fn = pl.pallas_call(
        _block_kernel,
        out_shape=jax.ShapeDtypeStruct((B_pad, O_pad), jnp.float32),
        grid_spec=grid_spec,
        compiler_params=pltpu.CompilerParams(
            dimension_semantics=("parallel",),   # shards batch blocks across TCs on v7x
            vmem_limit_bytes=32 * 1024 * 1024,   # tiny working set; headroom on all gens
        ),
    )
    out = fn(x_emb, pvec, wqkv, w1, w2, wo)
    return out[:B, :O]


def reference_forward(token_ids, params):
    """Pure-JAX f32 reference matching the PyTorch module (dropout = 0)."""
    B, T = token_ids.shape
    D = params["emb_table"].shape[1]
    x = jnp.take(params["emb_table"], token_ids, axis=0) + params["pos_table"][:T][None]
    x = x.astype(jnp.float32)

    xn1 = _layer_norm(x, params["ln1_gamma"], params["ln1_beta"])
    q = xn1 @ params["wq"]
    k = xn1 @ params["wk"]
    v = xn1 @ params["wv"]
    wei = jnp.einsum('bqd,bkd->bqk', q, k) * (float(D) ** -0.5)
    wei = jax.nn.softmax(wei, axis=-1)
    x = x + jnp.einsum('bqk,bkd->bqd', wei, v)

    xn2 = _layer_norm(x, params["ln2_gamma"], params["ln2_beta"])
    h = jnp.maximum(xn2 @ params["w1"] + params["b1"], 0.0)
    x = x + (h @ params["w2"] + params["b2"])

    xm = jnp.mean(x, axis=1)
    return xm @ params["wo"] + params["bo"]


def init_params(key, vocab_size, dim, max_length, output_size):
    ks = jax.random.split(key, 12)
    Hd = dim                     # head_size = dim // n_head, n_head = 1
    hidden = 4 * dim
    s = 0.02
    return {
        "emb_table": jax.random.normal(ks[0], (vocab_size, dim), jnp.float32),
        "pos_table": s * jax.random.normal(ks[1], (max_length, dim), jnp.float32),
        "wq": s * jax.random.normal(ks[2], (dim, Hd), jnp.float32),
        "wk": s * jax.random.normal(ks[3], (dim, Hd), jnp.float32),
        "wv": s * jax.random.normal(ks[4], (dim, Hd), jnp.float32),
        "w1": s * jax.random.normal(ks[5], (dim, hidden), jnp.float32),
        "b1": jnp.zeros((hidden,), jnp.float32),
        "w2": s * jax.random.normal(ks[6], (hidden, dim), jnp.float32),
        "b2": jnp.zeros((dim,), jnp.float32),
        "wo": s * jax.random.normal(ks[7], (dim, output_size), jnp.float32),
        "bo": jnp.zeros((output_size,), jnp.float32),
        "ln1_gamma": jnp.ones((dim,), jnp.float32),
        "ln1_beta": jnp.zeros((dim,), jnp.float32),
        "ln2_gamma": jnp.ones((dim,), jnp.float32),
        "ln2_beta": jnp.zeros((dim,), jnp.float32),
    }


if __name__ == "__main__":
    B, T = 2, 8
    vocab_size, dim = 50, 32
    max_length, output_size = 60, 10

    key = jax.random.PRNGKey(0)
    pkey, xkey = jax.random.split(key)
    params = init_params(pkey, vocab_size, dim, max_length, output_size)
    token_ids = jax.random.randint(xkey, (B, T), 0, vocab_size, dtype=jnp.int32)

    logits = simple_self_attention_forward(token_ids, params)
    jax.block_until_ready(logits)
    assert logits.shape == (B, output_size)
    assert logits.dtype == jnp.float32

    # Loose-tolerance functional check against a pure-JAX f32 reference
    # (kernel uses bf16 MXU operands + approx softmax reciprocal).
    ref = reference_forward(token_ids, params)
    max_err = float(jnp.max(jnp.abs(logits - ref)))
    assert max_err < 5e-2, f"kernel vs reference max abs err {max_err}"

    print("KERNEL_OK")
</pallas_src>

<mosaic_0001>
module attributes {stable_mosaic.version = 11 : i64} {
  func.func @_block_kernel(%arg0: i32, %arg1: memref<8x8x32xf32, #tpu.memory_space<vmem>>, %arg2: memref<8x128xf32, #tpu.memory_space<vmem>>, %arg3: memref<32x96xbf16, #tpu.memory_space<vmem>>, %arg4: memref<32x128xbf16, #tpu.memory_space<vmem>>, %arg5: memref<128x32xbf16, #tpu.memory_space<vmem>>, %arg6: memref<32x128xbf16, #tpu.memory_space<vmem>>, %arg7: memref<8x128xf32, #tpu.memory_space<vmem>>) attributes {dimension_semantics = [#tpu.dimension_semantics<parallel>], iteration_bounds = array<i64: 1>, scalar_prefetch = 0 : i64, scratch_operands = 0 : i64, tpu.core_type = #tpu.core_type<tc>, window_params = [{transform_indices = @transform_0, window_bounds = array<i64: 8, 8, 32>}, {pipeline_mode = #tpu.pipeline_mode<synchronous>, transform_indices = @transform_1, window_bounds = array<i64: 8, 128>}, {pipeline_mode = #tpu.pipeline_mode<synchronous>, transform_indices = @transform_2, window_bounds = array<i64: 32, 96>}, {pipeline_mode = #tpu.pipeline_mode<synchronous>, transform_indices = @transform_3, window_bounds = array<i64: 32, 128>}, {pipeline_mode = #tpu.pipeline_mode<synchronous>, transform_indices = @transform_4, window_bounds = array<i64: 128, 32>}, {pipeline_mode = #tpu.pipeline_mode<synchronous>, transform_indices = @transform_5, window_bounds = array<i64: 32, 128>}, {transform_indices = @transform_6, window_bounds = array<i64: 8, 128>}]} {
    %c0 = arith.constant 0 : index
    %c0_0 = arith.constant 0 : index
    %0 = vector.load %arg2[%c0, %c0_0] : memref<8x128xf32, #tpu.memory_space<vmem>>, vector<1x32xf32>
    %c1 = arith.constant 1 : index
    %c0_1 = arith.constant 0 : index
    %1 = vector.load %arg2[%c1, %c0_1] : memref<8x128xf32, #tpu.memory_space<vmem>>, vector<1x32xf32>
    %c2 = arith.constant 2 : index
    %c0_2 = arith.constant 0 : index
    %2 = vector.load %arg2[%c2, %c0_2] : memref<8x128xf32, #tpu.memory_space<vmem>>, vector<1x32xf32>
    %c3 = arith.constant 3 : index
    %c0_3 = arith.constant 0 : index
    %3 = vector.load %arg2[%c3, %c0_3] : memref<8x128xf32, #tpu.memory_space<vmem>>, vector<1x32xf32>
    %c4 = arith.constant 4 : index
    %c0_4 = arith.constant 0 : index
    %4 = vector.load %arg2[%c4, %c0_4] : memref<8x128xf32, #tpu.memory_space<vmem>>, vector<1x128xf32>
    %c5 = arith.constant 5 : index
    %c0_5 = arith.constant 0 : index
    %5 = vector.load %arg2[%c5, %c0_5] : memref<8x128xf32, #tpu.memory_space<vmem>>, vector<1x32xf32>
    %c6 = arith.constant 6 : index
    %c0_6 = arith.constant 0 : index
    %6 = vector.load %arg2[%c6, %c0_6] : memref<8x128xf32, #tpu.memory_space<vmem>>, vector<1x128xf32>
    %c0_7 = arith.constant 0 : index
    %c0_8 = arith.constant 0 : index
    %c0_9 = arith.constant 0 : index
    %7 = vector.load %arg1[%c0_7, %c0_8, %c0_9] : memref<8x8x32xf32, #tpu.memory_space<vmem>>, vector<8x8x32xf32>
    %8 = vector.shape_cast %7 : vector<8x8x32xf32> to vector<64x32xf32>
    %cst = arith.constant dense<0.000000e+00> : vector<64xf32>
    %9 = vector.multi_reduction <add>, %8, %cst [1] : vector<64x32xf32> to vector<64xf32>
    %10 = vector.shape_cast %9 : vector<64xf32> to vector<64x1xf32>
    %cst_10 = arith.constant 3.200000e+01 : f32
    %11 = vector.broadcast %cst_10 : f32 to vector<64x1xf32>
    %12 = arith.divf %10, %11 : vector<64x1xf32>
    %13 = vector.broadcast %12 : vector<64x1xf32> to vector<64x32xf32>
    %14 = arith.subf %8, %13 : vector<64x32xf32>
    %15 = arith.mulf %14, %14 : vector<64x32xf32>
    %cst_11 = arith.constant dense<0.000000e+00> : vector<64xf32>
    %16 = vector.multi_reduction <add>, %15, %cst_11 [1] : vector<64x32xf32> to vector<64xf32>
    %17 = vector.shape_cast %16 : vector<64xf32> to vector<64x1xf32>
    %cst_12 = arith.constant 3.200000e+01 : f32
    %18 = vector.broadcast %cst_12 : f32 to vector<64x1xf32>
    %19 = arith.divf %17, %18 : vector<64x1xf32>
    %20 = vector.broadcast %12 : vector<64x1xf32> to vector<64x32xf32>
    %21 = arith.subf %8, %20 : vector<64x32xf32>
    %cst_13 = arith.constant 9.99999974E-6 : f32
    %22 = vector.broadcast %cst_13 : f32 to vector<64x1xf32>
    %23 = arith.addf %19, %22 : vector<64x1xf32>
    %24 = math.rsqrt %23 : vector<64x1xf32>
    %25 = vector.broadcast %24 : vector<64x1xf32> to vector<64x32xf32>
    %26 = arith.mulf %21, %25 : vector<64x32xf32>
    %27 = vector.broadcast %0 : vector<1x32xf32> to vector<64x32xf32>
    %28 = arith.mulf %26, %27 : vector<64x32xf32>
    %29 = vector.broadcast %1 : vector<1x32xf32> to vector<64x32xf32>
    %30 = arith.addf %28, %29 : vector<64x32xf32>
    %31 = arith.truncf %30 : vector<64x32xf32> to vector<64x32xbf16>
    %c0_14 = arith.constant 0 : index
    %c0_15 = arith.constant 0 : index
    %32 = vector.load %arg3[%c0_14, %c0_15] : memref<32x96xbf16, #tpu.memory_space<vmem>>, vector<32x96xbf16>
    %cst_16 = arith.constant dense<0.000000e+00> : vector<64x96xf32>
    %33 = tpu.matmul %31, %32, %cst_16 {dimension_numbers = #tpu.dot_dimension_numbers<[1], [0], [0], [1], [0, 0, 1, 1], [], []>} : vector<64x32xbf16>, vector<32x96xbf16>, vector<64x96xf32> -> vector<64x96xf32>
    %34 = vector.shape_cast %33 : vector<64x96xf32> to vector<8x8x96xf32>
    %35 = vector.extract_strided_slice %34 {offsets = [0, 0, 0], sizes = [8, 8, 32], strides = [1, 1, 1]} : vector<8x8x96xf32> to vector<8x8x32xf32>
    %36 = vector.extract_strided_slice %34 {offsets = [0, 0, 32], sizes = [8, 8, 32], strides = [1, 1, 1]} : vector<8x8x96xf32> to vector<8x8x32xf32>
    %37 = vector.extract_strided_slice %34 {offsets = [0, 0, 64], sizes = [8, 8, 32], strides = [1, 1, 1]} : vector<8x8x96xf32> to vector<8x8x32xf32>
    %38 = arith.truncf %35 : vector<8x8x32xf32> to vector<8x8x32xbf16>
    %39 = arith.truncf %36 : vector<8x8x32xf32> to vector<8x8x32xbf16>
    "tpu.trace_start"() <{level = 10 : i32, message = "bqd,bkd->bqk"}> : () -> ()
    %cst_17 = arith.constant dense<0.000000e+00> : vector<8x8x8xf32>
    %40 = tpu.matmul %38, %39, %cst_17 {dimension_numbers = #tpu.dot_dimension_numbers<[2], [2], [1], [1], [0, 0, 0, 1, 1, 1], [0], [0]>} : vector<8x8x32xbf16>, vector<8x8x32xbf16>, vector<8x8x8xf32> -> vector<8x8x8xf32>
    "tpu.trace_stop"() : () -> ()
    %cst_18 = arith.constant 0.176776692 : f32
    %41 = vector.broadcast %cst_18 : f32 to vector<8x8x8xf32>
    %42 = arith.mulf %40, %41 : vector<8x8x8xf32>
    %cst_19 = arith.constant dense<0xFF800000> : vector<8x8xf32>
    %43 = vector.multi_reduction <maximumf>, %42, %cst_19 [2] : vector<8x8x8xf32> to vector<8x8xf32>
    %44 = vector.shape_cast %43 : vector<8x8xf32> to vector<8x8x1xf32>
    %45 = vector.broadcast %44 : vector<8x8x1xf32> to vector<8x8x8xf32>
    %46 = arith.subf %42, %45 : vector<8x8x8xf32>
    %47 = math.exp %46 : vector<8x8x8xf32>
    %cst_20 = arith.constant dense<0.000000e+00> : vector<8x8xf32>
    %48 = vector.multi_reduction <add>, %47, %cst_20 [2] : vector<8x8x8xf32> to vector<8x8xf32>
    %49 = vector.shape_cast %48 : vector<8x8xf32> to vector<8x8x1xf32>
    %50 = tpu.reciprocal %49 {approx = true} : vector<8x8x1xf32> -> vector<8x8x1xf32>
    %51 = vector.broadcast %50 : vector<8x8x1xf32> to vector<8x8x8xf32>
    %52 = arith.mulf %47, %51 : vector<8x8x8xf32>
    %53 = arith.truncf %52 : vector<8x8x8xf32> to vector<8x8x8xbf16>
    %54 = arith.truncf %37 : vector<8x8x32xf32> to vector<8x8x32xbf16>
    "tpu.trace_start"() <{level = 10 : i32, message = "bqk,bkd->bqd"}> : () -> ()
    %cst_21 = arith.constant dense<0.000000e+00> : vector<8x8x32xf32>
    %55 = tpu.matmul %53, %54, %cst_21 {dimension_numbers = #tpu.dot_dimension_numbers<[2], [1], [1], [2], [0, 0, 0, 1, 1, 2], [0], [0]>} : vector<8x8x8xbf16>, vector<8x8x32xbf16>, vector<8x8x32xf32> -> vector<8x8x32xf32>
    "tpu.trace_stop"() : () -> ()
    %56 = vector.shape_cast %55 : vector<8x8x32xf32> to vector<64x32xf32>
    %57 = arith.addf %8, %56 : vector<64x32xf32>
    %cst_22 = arith.constant dense<0.000000e+00> : vector<64xf32>
    %58 = vector.multi_reduction <add>, %57, %cst_22 [1] : vector<64x32xf32> to vector<64xf32>
    %59 = vector.shape_cast %58 : vector<64xf32> to vector<64x1xf32>
    %cst_23 = arith.constant 3.200000e+01 : f32
    %60 = vector.broadcast %cst_23 : f32 to vector<64x1xf32>
    %61 = arith.divf %59, %60 : vector<64x1xf32>
    %62 = vector.broadcast %61 : vector<64x1xf32> to vector<64x32xf32>
    %63 = arith.subf %57, %62 : vector<64x32xf32>
    %64 = arith.mulf %63, %63 : vector<64x32xf32>
    %cst_24 = arith.constant dense<0.000000e+00> : vector<64xf32>
    %65 = vector.multi_reduction <add>, %64, %cst_24 [1] : vector<64x32xf32> to vector<64xf32>
    %66 = vector.shape_cast %65 : vector<64xf32> to vector<64x1xf32>
    %cst_25 = arith.constant 3.200000e+01 : f32
    %67 = vector.broadcast %cst_25 : f32 to vector<64x1xf32>
    %68 = arith.divf %66, %67 : vector<64x1xf32>
    %69 = vector.broadcast %61 : vector<64x1xf32> to vector<64x32xf32>
    %70 = arith.subf %57, %69 : vector<64x32xf32>
    %cst_26 = arith.constant 9.99999974E-6 : f32
    %71 = vector.broadcast %cst_26 : f32 to vector<64x1xf32>
    %72 = arith.addf %68, %71 : vector<64x1xf32>
    %73 = math.rsqrt %72 : vector<64x1xf32>
    %74 = vector.broadcast %73 : vector<64x1xf32> to vector<64x32xf32>
    %75 = arith.mulf %70, %74 : vector<64x32xf32>
    %76 = vector.broadcast %2 : vector<1x32xf32> to vector<64x32xf32>
    %77 = arith.mulf %75, %76 : vector<64x32xf32>
    %78 = vector.broadcast %3 : vector<1x32xf32> to vector<64x32xf32>
    %79 = arith.addf %77, %78 : vector<64x32xf32>
    %80 = arith.truncf %79 : vector<64x32xf32> to vector<64x32xbf16>
    %c0_27 = arith.constant 0 : index
    %c0_28 = arith.constant 0 : index
    %81 = vector.load %arg4[%c0_27, %c0_28] : memref<32x128xbf16, #tpu.memory_space<vmem>>, vector<32x128xbf16>
    %cst_29 = arith.constant dense<0.000000e+00> : vector<64x128xf32>
    %82 = tpu.matmul %80, %81, %cst_29 {dimension_numbers = #tpu.dot_dimension_numbers<[1], [0], [0], [1], [0, 0, 1, 1], [], []>} : vector<64x32xbf16>, vector<32x128xbf16>, vector<64x128xf32> -> vector<64x128xf32>
    %83 = vector.broadcast %4 : vector<1x128xf32> to vector<64x128xf32>
    %84 = arith.addf %82, %83 : vector<64x128xf32>
    %cst_30 = arith.constant 0.000000e+00 : f32
    %85 = vector.broadcast %cst_30 : f32 to vector<64x128xf32>
    %86 = arith.maximumf %84, %85 : vector<64x128xf32>
    %87 = arith.truncf %86 : vector<64x128xf32> to vector<64x128xbf16>
    %c0_31 = arith.constant 0 : index
    %c0_32 = arith.constant 0 : index
    %88 = vector.load %arg5[%c0_31, %c0_32] : memref<128x32xbf16, #tpu.memory_space<vmem>>, vector<128x32xbf16>
    %cst_33 = arith.constant dense<0.000000e+00> : vector<64x32xf32>
    %89 = tpu.matmul %87, %88, %cst_33 {dimension_numbers = #tpu.dot_dimension_numbers<[1], [0], [0], [1], [0, 0, 1, 1], [], []>} : vector<64x128xbf16>, vector<128x32xbf16>, vector<64x32xf32> -> vector<64x32xf32>
    %90 = vector.broadcast %5 : vector<1x32xf32> to vector<64x32xf32>
    %91 = arith.addf %89, %90 : vector<64x32xf32>
    %92 = arith.addf %57, %91 : vector<64x32xf32>
    %93 = vector.shape_cast %92 : vector<64x32xf32> to vector<8x8x32xf32>
    %cst_34 = arith.constant dense<0.000000e+00> : vector<8x32xf32>
    %94 = vector.multi_reduction <add>, %93, %cst_34 [1] : vector<8x8x32xf32> to vector<8x32xf32>
    %cst_35 = arith.constant 8.000000e+00 : f32
    %95 = vector.broadcast %cst_35 : f32 to vector<8x32xf32>
    %96 = arith.divf %94, %95 : vector<8x32xf32>
    %97 = arith.truncf %96 : vector<8x32xf32> to vector<8x32xbf16>
    %c0_36 = arith.constant 0 : index
    %c0_37 = arith.constant 0 : index
    %98 = vector.load %arg6[%c0_36, %c0_37] : memref<32x128xbf16, #tpu.memory_space<vmem>>, vector<32x128xbf16>
    %cst_38 = arith.constant dense<0.000000e+00> : vector<8x128xf32>
    %99 = tpu.matmul %97, %98, %cst_38 {dimension_numbers = #tpu.dot_dimension_numbers<[1], [0], [0], [1], [0, 0, 1, 1], [], []>} : vector<8x32xbf16>, vector<32x128xbf16>, vector<8x128xf32> -> vector<8x128xf32>
    %100 = vector.broadcast %6 : vector<1x128xf32> to vector<8x128xf32>
    %101 = arith.addf %99, %100 : vector<8x128xf32>
    %c0_39 = arith.constant 0 : index
    %c0_40 = arith.constant 0 : index
    %102 = vector.load %arg7[%c0_39, %c0_40] : memref<8x128xf32, #tpu.memory_space<vmem>>, vector<8x128xf32>
    tpu.vector_store %arg7[%c0_39, %c0_40], %101 {strides = array<i32>} : memref<8x128xf32, #tpu.memory_space<vmem>>, vector<8x128xf32>,
    return
  }
  func.func @transform_0(%arg0: i32) -> (i32, i32, i32) {
    %c0_i32 = arith.constant 0 : i32
    %c0_i32_0 = arith.constant 0 : i32
    %c0_i32_1 = arith.constant 0 : i32
    return %arg0, %c0_i32, %c0_i32_0 : i32, i32, i32
  }
  func.func @transform_1(%arg0: i32) -> (i32, i32) {
    %c0_i32 = arith.constant 0 : i32
    %c0_i32_0 = arith.constant 0 : i32
    %c0_i32_1 = arith.constant 0 : i32
    return %c0_i32, %c0_i32_0 : i32, i32
  }
  func.func @transform_2(%arg0: i32) -> (i32, i32) {
    %c0_i32 = arith.constant 0 : i32
    %c0_i32_0 = arith.constant 0 : i32
    %c0_i32_1 = arith.constant 0 : i32
    return %c0_i32, %c0_i32_0 : i32, i32
  }
  func.func @transform_3(%arg0: i32) -> (i32, i32) {
    %c0_i32 = arith.constant 0 : i32
    %c0_i32_0 = arith.constant 0 : i32
    %c0_i32_1 = arith.constant 0 : i32
    return %c0_i32, %c0_i32_0 : i32, i32
  }
  func.func @transform_4(%arg0: i32) -> (i32, i32) {
    %c0_i32 = arith.constant 0 : i32
    %c0_i32_0 = arith.constant 0 : i32
    %c0_i32_1 = arith.constant 0 : i32
    return %c0_i32, %c0_i32_0 : i32, i32
  }
  func.func @transform_5(%arg0: i32) -> (i32, i32) {
    %c0_i32 = arith.constant 0 : i32
    %c0_i32_0 = arith.constant 0 : i32
    %c0_i32_1 = arith.constant 0 : i32
    return %c0_i32, %c0_i32_0 : i32, i32
  }
  func.func @transform_6(%arg0: i32) -> (i32, i32) {
    %c0_i32 = arith.constant 0 : i32
    %c0_i32_0 = arith.constant 0 : i32
    return %arg0, %c0_i32 : i32, i32
  }
}

</mosaic_0001>

<llo_original>
// kernel: tpu_custom_call.1
$region0: #{tpu_custom_call.1}
  #allocation0 [shape = 'u32[]', space=smem, size = 0x4, offset = 0x4, fixed_abs, tag = 'smem constant byte address 0x4 - core index']
  #allocation1 [shape = 'u32[144,128]{1,0:T(1,128)}', space=vmem, size = 0x12000, scoped, tag = 'internal scratch']
  %s0 = inlined_call_operand.vmem [shape: f32[8,8,32], index: 0, kind: input, shape index: {}]
  %s1 = inlined_call_operand.hbm [shape: f32[8,128], index: 1, kind: input, shape index: {}]
  %s2 = inlined_call_operand.vmem [shape: bf16[32,96], index: 2, kind: input, shape index: {}]
  %s3 = inlined_call_operand.hbm [shape: bf16[32,128], index: 3, kind: input, shape index: {}]
  %s4 = inlined_call_operand.vmem [shape: bf16[128,32], index: 4, kind: input, shape index: {}]
  %s5 = inlined_call_operand.vmem [shape: bf16[32,128], index: 5, kind: input, shape index: {}]
  %s6 = inlined_call_operand.hbm [shape: f32[8,128], index: 6, kind: output, shape index: {}]
  %s7 = sld [smem:[#allocation0]]
  $region42: #{tpu_custom_call.1} parent=0
    _
  %s9 = ssub.s32 1, %s7
  %s10 = scalar_select 0, %s9, %s7
  $region1: #{tpu_custom_call.1} parent=0
    #allocation2 [shape = 'u8[4096]{0}', space=vmem, size = 0x1000, scoped, tag = 'input window, operand 1, single buffered']
    #allocation3 [shape = 's32[1]{0}', space=sflag, size = 0x4, scoped, tag = 'scoped memory for tpu_custom_call.1']
    #allocation4 [shape = 's32[1]{0}', space=sflag, size = 0x4, scoped, tag = 'scoped memory for tpu_custom_call.1']
    #allocation5 [shape = 'u8[8192]{0}', space=vmem, size = 0x2000, scoped, tag = 'input window, operand 3, single buffered']
    #allocation6 [shape = 's32[1]{0}', space=sflag, size = 0x4, scoped, tag = 'scoped memory for tpu_custom_call.1']
    #allocation7 [shape = 'u8[4096]{0}', space=vmem, size = 0x1000, scoped, tag = 'output window, operand 0, single buffered']
    %11 = vsyncpa [#allocation3], 0
    %12 = vsyncpa [#allocation6], 0
    %13 = vsyncpa [#allocation4], 0
    // Predicated region
    $region2: #{tpu_custom_call.1} parent=1 // pred_check
      _
    $region3: #{tpu_custom_call.1} parent=1 // pred_check_branch
      %15 = sbr.rel (0) target = $region5
    $region4: #{tpu_custom_call.1} parent=1 // pred_region
      _
    $region5: #{tpu_custom_call.1} parent=1 // pred_fallthru
      _
    // Predicated region
    $region6: #{tpu_custom_call.1} parent=1 // pred_check
      _
    $region7: #{tpu_custom_call.1} parent=1 // pred_check_branch
      %17 = sbr.rel (0) target = $region9
    $region8: #{tpu_custom_call.1} parent=1 // pred_region
      %s19 = ssub.s32 128, 128
      %20 = vsyncadd [#allocation3], %s19
      %s22 = sshll.u32 [#allocation2], 4
      %s23 = int_to_ptr.vmem [resolvable:$true] %s22
      %25 = dma.hbm_to_vmem [thread:$0]  %s1, 128, %s23, [#allocation3]
    $region9: #{tpu_custom_call.1} parent=1 // pred_fallthru
      _
    // Predicated region
    $region10: #{tpu_custom_call.1} parent=1 // pred_check
      _
    $region11: #{tpu_custom_call.1} parent=1 // pred_check_branch
      %27 = sbr.rel (0) target = $region13
    $region12: #{tpu_custom_call.1} parent=1 // pred_region
      _
    $region13: #{tpu_custom_call.1} parent=1 // pred_fallthru
      _
    // Predicated region
    $region14: #{tpu_custom_call.1} parent=1 // pred_check
      _
    $region15: #{tpu_custom_call.1} parent=1 // pred_check_branch
      %29 = sbr.rel (0) target = $region17
    $region16: #{tpu_custom_call.1} parent=1 // pred_region
      %s31 = ssub.s32 256, 256
      %32 = vsyncadd [#allocation6], %s31
      %s33 = sshll.u32 [#allocation5], 4
      %s34 = int_to_ptr.vmem [resolvable:$true] %s33
      %39 = dma.hbm_to_vmem [thread:$0]  %s3, 256, %s34, [#allocation6], 64, 64, 4
    $region17: #{tpu_custom_call.1} parent=1 // pred_fallthru
      _
    // Predicated region
    $region18: #{tpu_custom_call.1} parent=1 // pred_check
      _
    $region19: #{tpu_custom_call.1} parent=1 // pred_check_branch
      %41 = sbr.rel (0) target = $region21
    $region20: #{tpu_custom_call.1} parent=1 // pred_region
      _
    $region21: #{tpu_custom_call.1} parent=1 // pred_fallthru
      _
    // Predicated region
    $region22: #{tpu_custom_call.1} parent=1 // pred_check
      _
    $region23: #{tpu_custom_call.1} parent=1 // pred_check_branch
      %43 = sbr.rel (0) target = $region25
    $region24: #{tpu_custom_call.1} parent=1 // pred_region
      _
    $region25: #{tpu_custom_call.1} parent=1 // pred_fallthru
      _
    // Predicated region
    $region26: #{tpu_custom_call.1} parent=1 // pred_check
      _
    $region27: #{tpu_custom_call.1} parent=1 // pred_check_branch
      %45 = sbr.rel (0) target = $region29
    $region28: #{tpu_custom_call.1} parent=1 // pred_region
      %46 = dma.done [#allocation3], 128
    $region29: #{tpu_custom_call.1} parent=1 // pred_fallthru
      _
    // Predicated region
    $region30: #{tpu_custom_call.1} parent=1 // pred_check
      _
    $region31: #{tpu_custom_call.1} parent=1 // pred_check_branch
      %48 = sbr.rel (0) target = $region33
    $region32: #{tpu_custom_call.1} parent=1 // pred_region
      %49 = dma.done [#allocation6], 256
    $region33: #{tpu_custom_call.1} parent=1 // pred_fallthru
      _
    %v51 = vld [vmem:[#allocation2] sm:$0x1]
    %v52 = vld [vmem:[#allocation2 + $0x1] sm:$0x1]
    %v53 = vld [vmem:[#allocation2 + $0x2] sm:$0x1]
    %v54 = vld [vmem:[#allocation2 + $0x3] sm:$0x1]
    %v55 = vld [vmem:[#allocation2 + $0x4] sm:$0x1]
    %v56 = vld [vmem:[#allocation2 + $0x5] sm:$0x1]
    %v57 = vld [vmem:[#allocation2 + $0x6] sm:$0x1]
    %v58 = vld [vmem:[%s0] sm:$0xff]
    %v59 = vld [vmem:[%s0 + $0x8] sm:$0xff]
    %v60 = vld [vmem:[%s0 + $0x10] sm:$0xff]
    %v61 = vld [vmem:[%s0 + $0x18] sm:$0xff]
    %v62 = vld [vmem:[%s0 + $0x20] sm:$0xff]
    %v63 = vld [vmem:[%s0 + $0x28] sm:$0xff]
    %v64 = vld [vmem:[%s0 + $0x30] sm:$0xff]
    %v65 = vld [vmem:[%s0 + $0x38] sm:$0xff]
    %vm66 = vcmask 261120
    %v67 = vsel %vm66, %v58, 0.0
    %68 = vadd.xlane.f32.xlu0 %v67
    %v69 = vpop.xlane.xlu0 %68
    %v70 = vsel %vm66, %v59, 0.0
    %71 = vadd.xlane.f32.xlu0 %v70
    %v72 = vpop.xlane.xlu0 %71
    %v73 = vsel %vm66, %v60, 0.0
    %74 = vadd.xlane.f32.xlu0 %v73
    %v75 = vpop.xlane.xlu0 %74
    %v76 = vsel %vm66, %v61, 0.0
    %77 = vadd.xlane.f32.xlu0 %v76
    %v78 = vpop.xlane.xlu0 %77
    %v79 = vsel %vm66, %v62, 0.0
    %80 = vadd.xlane.f32.xlu0 %v79
    %v81 = vpop.xlane.xlu0 %80
    %v82 = vsel %vm66, %v63, 0.0
    %83 = vadd.xlane.f32.xlu0 %v82
    %v84 = vpop.xlane.xlu0 %83
    %v85 = vsel %vm66, %v64, 0.0
    %86 = vadd.xlane.f32.xlu0 %v85
    %v87 = vpop.xlane.xlu0 %86
    %v88 = vsel %vm66, %v65, 0.0
    %89 = vadd.xlane.f32.xlu0 %v88
    %v90 = vpop.xlane.xlu0 %89
    %v91 = vrcp.pop 32.0
    %v92 = vmul.f32 %v69, %v91
    %v93 = vmul.f32 %v72, %v91
    %v94 = vmul.f32 %v75, %v91
    %v95 = vmul.f32 %v78, %v91
    %v96 = vmul.f32 %v81, %v91
    %v97 = vmul.f32 %v84, %v91
    %v98 = vmul.f32 %v87, %v91
    %v99 = vmul.f32 %v90, %v91
    %v100 = vsub.f32 %v58, %v92
    %v101 = vsub.f32 %v59, %v93
    %v102 = vsub.f32 %v60, %v94
    %v103 = vsub.f32 %v61, %v95
    %v104 = vsub.f32 %v62, %v96
    %v105 = vsub.f32 %v63, %v97
    %v106 = vsub.f32 %v64, %v98
    %v107 = vsub.f32 %v65, %v99
    %v108 = vmul.f32 %v100, %v100
    %v109 = vmul.f32 %v101, %v101
    %v110 = vmul.f32 %v102, %v102
    %v111 = vmul.f32 %v103, %v103
    %v112 = vmul.f32 %v104, %v104
    %v113 = vmul.f32 %v105, %v105
    %v114 = vmul.f32 %v106, %v106
    %v115 = vmul.f32 %v107, %v107
    %v116 = vsel %vm66, %v108, 0.0
    %117 = vadd.xlane.f32.xlu0 %v116
    %v118 = vpop.xlane.xlu0 %117
    %v119 = vsel %vm66, %v109, 0.0
    %120 = vadd.xlane.f32.xlu0 %v119
    %v121 = vpop.xlane.xlu0 %120
    %v122 = vsel %vm66, %v110, 0.0
    %123 = vadd.xlane.f32.xlu0 %v122
    %v124 = vpop.xlane.xlu0 %123
    %v125 = vsel %vm66, %v111, 0.0
    %126 = vadd.xlane.f32.xlu0 %v125
    %v127 = vpop.xlane.xlu0 %126
    %v128 = vsel %vm66, %v112, 0.0
    %129 = vadd.xlane.f32.xlu0 %v128
    %v130 = vpop.xlane.xlu0 %129
    %v131 = vsel %vm66, %v113, 0.0
    %132 = vadd.xlane.f32.xlu0 %v131
    %v133 = vpop.xlane.xlu0 %132
    %v134 = vsel %vm66, %v114, 0.0
    %135 = vadd.xlane.f32.xlu0 %v134
    %v136 = vpop.xlane.xlu0 %135
    %v137 = vsel %vm66, %v115, 0.0
    %138 = vadd.xlane.f32.xlu0 %v137
    %v139 = vpop.xlane.xlu0 %138
    %v140 = vmul.f32 %v118, %v91
    %v141 = vmul.f32 %v121, %v91
    %v142 = vmul.f32 %v124, %v91
    %v143 = vmul.f32 %v127, %v91
    %v144 = vmul.f32 %v130, %v91
    %v145 = vmul.f32 %v133, %v91
    %v146 = vmul.f32 %v136, %v91
    %v147 = vmul.f32 %v139, %v91
    %v148 = vadd.f32 %v140, 1e-05
    %v149 = vadd.f32 %v141, 1e-05
    %v150 = vadd.f32 %v142, 1e-05
    %v151 = vadd.f32 %v143, 1e-05
    %v152 = vadd.f32 %v144, 1e-05
    %v153 = vadd.f32 %v145, 1e-05
    %v154 = vadd.f32 %v146, 1e-05
    %v155 = vadd.f32 %v147, 1e-05
    %v156 = vrsqrt.pop %v148
    %v157 = vrsqrt.pop %v149
    %v158 = vrsqrt.pop %v150
    %v159 = vrsqrt.pop %v151
    %v160 = vrsqrt.pop %v152
    %v161 = vrsqrt.pop %v153
    %v162 = vrsqrt.pop %v154
    %v163 = vrsqrt.pop %v155
    %v164 = vmul.f32 %v100, %v156
    %v165 = vmul.f32 %v101, %v157
    %v166 = vmul.f32 %v102, %v158
    %v167 = vmul.f32 %v103, %v159
    %v168 = vmul.f32 %v104, %v160
    %v169 = vmul.f32 %v105, %v161
    %v170 = vmul.f32 %v106, %v162
    %v171 = vmul.f32 %v107, %v163
    %v172 = vlaneseq
    %v173 = vshrl.u32 %v172, 7
    %v174 = vsub.s32 0, %v173
    %v175 = vrot.slane %v51, %v174
    %v176 = vmul.f32 %v164, %v175
    %v177 = vmul.f32 %v165, %v175
    %v178 = vmul.f32 %v166, %v175
    %v179 = vmul.f32 %v167, %v175
    %v180 = vmul.f32 %v168, %v175
    %v181 = vmul.f32 %v169, %v175
    %v182 = vmul.f32 %v170, %v175
    %v183 = vmul.f32 %v171, %v175
    %v184 = vlaneseq
    %v185 = vshrl.u32 %v184, 7
    %v186 = vsub.s32 0, %v185
    %v187 = vrot.slane %v52, %v186
    %v188 = vadd.f32 %v176, %v187
    %v189 = vadd.f32 %v177, %v187
    %v190 = vadd.f32 %v178, %v187
    %v191 = vadd.f32 %v179, %v187
    %v192 = vadd.f32 %v180, %v187
    %v193 = vadd.f32 %v181, %v187
    %v194 = vadd.f32 %v182, %v187
    %v195 = vadd.f32 %v183, %v187
    %v196 = vpack.c.bf16 %v189, %v188
    %v197 = vpack.c.bf16 %v191, %v190
    %v198 = vpack.c.bf16 %v193, %v192
    %v199 = vpack.c.bf16 %v195, %v194
    %v200 = vld [vmem:[%s2] sm:$0xf]
    %v201 = vld [vmem:[%s2 + $0x4] sm:$0xf]
    %v202 = vld [vmem:[%s2 + $0x8] sm:$0xf]
    %v203 = vld [vmem:[%s2 + $0xc] sm:$0xf]
    %v208 = vunpack.c.l.b16 %v200
    %v209 = vunpack.c.l.b16 %v201
    %v210 = vunpack.c.l.b16 %v202
    %v211 = vunpack.c.l.b16 %v203
    %v212 = vpack.c.b16 %v209, %v208
    %v213 = vpack.c.b16 %v211, %v210
    %v217 = vsel %vm66, %v196, 0
    %v220 = vsel %vm66, %v197, 0
    %v223 = vsel %vm66, %v198, 0
    %v226 = vsel %vm66, %v199, 0
    %228 = vmatprep.subr.bf16.mxu0 0
    %229 = vmatpush1.bf16.msra.mxu0 %v212
    %230 = vmatprep.subr.bf16.mxu0 0
    %231 = vmatpush1.bf16.msra.mxu0 %v213
    %232 = vmatprep.subr.bf16.mxu0 0
    %233 = vmatpush1.bf16.msra.mxu0 0
    %234 = vmatprep.subr.bf16.mxu0 0
    %235 = vmatpush1.bf16.msra.mxu0 0
    %236 = vmatprep.subr.bf16.mxu0 0
    %237 = vmatpush1.bf16.msra.mxu0 0
    %238 = vmatprep.subr.bf16.mxu0 0
    %239 = vmatpush1.bf16.msra.mxu0 0
    %240 = vmatprep.subr.bf16.mxu0 0
    %241 = vmatpush1.bf16.msra.mxu0 0
    %242 = vmatprep.subr.bf16.mxu0 0
    %243 = vmatpush1.bf16.msra.mxu0 0
    %244 = vmatprep.subr.bf16.mxu0 0
    %245 = vmatpush1.bf16.msra.mxu0 0
    %246 = vmatprep.subr.bf16.mxu0 0
    %247 = vmatpush1.bf16.msra.mxu0 0
    %248 = vmatprep.subr.bf16.mxu0 0
    %249 = vmatpush1.bf16.msra.mxu0 0
    %250 = vmatprep.subr.bf16.mxu0 0
    %251 = vmatpush1.bf16.msra.mxu0 0
    %252 = vmatprep.subr.bf16.mxu0 0
    %253 = vmatpush1.bf16.msra.mxu0 0
    %254 = vmatprep.subr.bf16.mxu0 0
    %255 = vmatpush1.bf16.msra.mxu0 0
    %256 = vmatprep.subr.bf16.mxu0 0
    %257 = vmatpush1.bf16.msra.mxu0 0
    %258 = vmatprep.subr.bf16.mxu0 0
    %259 = vmatpush1.bf16.msra.mxu0 0
    %260 = vmatprep.mubr.bf16.mxu0 0
    %261 = vmatmul.mubr.bf16.gmra.mrb[0].mxu0 %v217
    %v262 = vpop.f32.mrb[0].mxu0
    %v263 = vadd.f32 0.0, %v262
    %v264 = vpop.f32.mrb[0].mxu0
    %v265 = vpop.f32.mrb[0].mxu0
    %v266 = vadd.f32 0.0, %v265
    %v267 = vpop.f32.mrb[0].mxu0
    %268 = vmatprep.mubr.bf16.mxu0 0
    %269 = vmatmul.mubr.bf16.gmra.mrb[0].mxu0 %v220
    %v270 = vpop.f32.mrb[0].mxu0
    %v271 = vadd.f32 0.0, %v270
    %v272 = vpop.f32.mrb[0].mxu0
    %v273 = vpop.f32.mrb[0].mxu0
    %v274 = vadd.f32 0.0, %v273
    %v275 = vpop.f32.mrb[0].mxu0
    %276 = vmatprep.mubr.bf16.mxu0 0
    %277 = vmatmul.mubr.bf16.gmra.mrb[0].mxu0 %v223
    %v278 = vpop.f32.mrb[0].mxu0
    %v279 = vadd.f32 0.0, %v278
    %v280 = vpop.f32.mrb[0].mxu0
    %v281 = vpop.f32.mrb[0].mxu0
    %v282 = vadd.f32 0.0, %v281
    %v283 = vpop.f32.mrb[0].mxu0
    %284 = vmatprep.mubr.bf16.mxu0 0
    %285 = vmatmul.mubr.bf16.gmra.mrb[0].mxu0 %v226
    %v286 = vpop.f32.mrb[0].mxu0
    %v287 = vadd.f32 0.0, %v286
    %v288 = vpop.f32.mrb[0].mxu0
    %v289 = vpop.f32.mrb[0].mxu0
    %v290 = vadd.f32 0.0, %v289
    %v291 = vpop.f32.mrb[0].mxu0
    %292 = vdwg.mxu0
    %v293 = vpack.c.bf16 %v263, %v263
    %v294 = vpack.c.bf16 %v266, %v266
    %v295 = vpack.c.bf16 %v271, %v271
    %v296 = vpack.c.bf16 %v274, %v274
    %v297 = vpack.c.bf16 %v279, %v279
    %v298 = vpack.c.bf16 %v282, %v282
    %v299 = vpack.c.bf16 %v287, %v287
    %v300 = vpack.c.bf16 %v290, %v290
    %302 = vrot.lane.b32.xlu0 %v293, 96
    %v303 = vpop.permute.xlu0 %302
    %v305 = vsel %vm66, %v293, 0
    %v308 = vsel %vm66, %v303, 0
    %310 = vmatprep.subr.bf16.mxu0 0
    %311 = vmatpush1.bf16.xpose.msra.mxu0 %v308
    %312 = vmatprep.subr.bf16.mxu0 0
    %313 = vmatpush1.bf16.xpose.msra.mxu0 0
    %314 = vmatprep.subr.bf16.mxu0 0
    %315 = vmatpush1.bf16.xpose.msra.mxu0 0
    %316 = vmatprep.subr.bf16.mxu0 0
    %317 = vmatpush1.bf16.xpose.msra.mxu0 0
    %318 = vmatprep.subr.bf16.mxu0 0
    %319 = vmatpush1.bf16.xpose.msra.mxu0 0
    %320 = vmatprep.subr.bf16.mxu0 0
    %321 = vmatpush1.bf16.xpose.msra.mxu0 0
    %322 = vmatprep.subr.bf16.mxu0 0
    %323 = vmatpush1.bf16.xpose.msra.mxu0 0
    %324 = vmatprep.subr.bf16.mxu0 0
    %325 = vmatpush1.bf16.xpose.msra.mxu0 0
    %326 = vmatprep.subr.bf16.mxu0 0
    %327 = vmatpush1.bf16.xpose.msra.mxu0 0
    %328 = vmatprep.subr.bf16.mxu0 0
    %329 = vmatpush1.bf16.xpose.msra.mxu0 0
    %330 = vmatprep.subr.bf16.mxu0 0
    %331 = vmatpush1.bf16.xpose.msra.mxu0 0
    %332 = vmatprep.subr.bf16.mxu0 0
    %333 = vmatpush1.bf16.xpose.msra.mxu0 0
    %334 = vmatprep.subr.bf16.mxu0 0
    %335 = vmatpush1.bf16.xpose.msra.mxu0 0
    %336 = vmatprep.subr.bf16.mxu0 0
    %337 = vmatpush1.bf16.xpose.msra.mxu0 0
    %338 = vmatprep.subr.bf16.mxu0 0
    %339 = vmatpush1.bf16.xpose.msra.mxu0 0
    %340 = vmatprep.subr.bf16.mxu0 0
    %341 = vmatpush1.bf16.xpose.msra.mxu0 0
    %342 = vmatprep.mubr.bf16.mxu0 0
    %343 = vmatmul.mubr.bf16.gmra.mrb[0].mxu0 %v305
    %v344 = vpop.f32.mrb[0].mxu0
    %v345 = vadd.f32 0.0, %v344
    %v346 = vpop.f32.mrb[0].mxu0
    %v347 = vpop.f32.mrb[0].mxu0
    %v348 = vpop.f32.mrb[0].mxu0
    %349 = vdwg.mxu0
    %351 = vrot.lane.b32.xlu0 %v294, 96
    %v352 = vpop.permute.xlu0 %351
    %v354 = vsel %vm66, %v294, 0
    %v357 = vsel %vm66, %v352, 0
    %359 = vmatprep.subr.bf16.mxu0 0
    %360 = vmatpush1.bf16.xpose.msra.mxu0 %v357
    %361 = vmatprep.subr.bf16.mxu0 0
    %362 = vmatpush1.bf16.xpose.msra.mxu0 0
    %363 = vmatprep.subr.bf16.mxu0 0
    %364 = vmatpush1.bf16.xpose.msra.mxu0 0
    %365 = vmatprep.subr.bf16.mxu0 0
    %366 = vmatpush1.bf16.xpose.msra.mxu0 0
    %367 = vmatprep.subr.bf16.mxu0 0
    %368 = vmatpush1.bf16.xpose.msra.mxu0 0
    %369 = vmatprep.subr.bf16.mxu0 0
    %370 = vmatpush1.bf16.xpose.msra.mxu0 0
    %371 = vmatprep.subr.bf16.mxu0 0
    %372 = vmatpush1.bf16.xpose.msra.mxu0 0
    %373 = vmatprep.subr.bf16.mxu0 0
    %374 = vmatpush1.bf16.xpose.msra.mxu0 0
    %375 = vmatprep.subr.bf16.mxu0 0
    %376 = vmatpush1.bf16.xpose.msra.mxu0 0
    %377 = vmatprep.subr.bf16.mxu0 0
    %378 = vmatpush1.bf16.xpose.msra.mxu0 0
    %379 = vmatprep.subr.bf16.mxu0 0
    %380 = vmatpush1.bf16.xpose.msra.mxu0 0
    %381 = vmatprep.subr.bf16.mxu0 0
    %382 = vmatpush1.bf16.xpose.msra.mxu0 0
    %383 = vmatprep.subr.bf16.mxu0 0
    %384 = vmatpush1.bf16.xpose.msra.mxu0 0
    %385 = vmatprep.subr.bf16.mxu0 0
    %386 = vmatpush1.bf16.xpose.msra.mxu0 0
    %387 = vmatprep.subr.bf16.mxu0 0
    %388 = vmatpush1.bf16.xpose.msra.mxu0 0
    %389 = vmatprep.subr.bf16.mxu0 0
    %390 = vmatpush1.bf16.xpose.msra.mxu0 0
    %391 = vmatprep.mubr.bf16.mxu0 0
    %392 = vmatmul.mubr.bf16.gmra.mrb[0].mxu0 %v354
    %v393 = vpop.f32.mrb[0].mxu0
    %v394 = vadd.f32 0.0, %v393
    %v395 = vpop.f32.mrb[0].mxu0
    %v396 = vpop.f32.mrb[0].mxu0
    %v397 = vpop.f32.mrb[0].mxu0
    %398 = vdwg.mxu0
    %400 = vrot.lane.b32.xlu0 %v295, 96
    %v401 = vpop.permute.xlu0 %400
    %v403 = vsel %vm66, %v295, 0
    %v406 = vsel %vm66, %v401, 0
    %408 = vmatprep.subr.bf16.mxu0 0
    %409 = vmatpush1.bf16.xpose.msra.mxu0 %v406
    %410 = vmatprep.subr.bf16.mxu0 0
    %411 = vmatpush1.bf16.xpose.msra.mxu0 0
    %412 = vmatprep.subr.bf16.mxu0 0
    %413 = vmatpush1.bf16.xpose.msra.mxu0 0
    %414 = vmatprep.subr.bf16.mxu0 0
    %415 = vmatpush1.bf16.xpose.msra.mxu0 0
    %416 = vmatprep.subr.bf16.mxu0 0
    %417 = vmatpush1.bf16.xpose.msra.mxu0 0
    %418 = vmatprep.subr.bf16.mxu0 0
    %419 = vmatpush1.bf16.xpose.msra.mxu0 0
    %420 = vmatprep.subr.bf16.mxu0 0
    %421 = vmatpush1.bf16.xpose.msra.mxu0 0
    %422 = vmatprep.subr.bf16.mxu0 0
    %423 = vmatpush1.bf16.xpose.msra.mxu0 0
    %424 = vmatprep.subr.bf16.mxu0 0
    %425 = vmatpush1.bf16.xpose.msra.mxu0 0
    %426 = vmatprep.subr.bf16.mxu0 0
    %427 = vmatpush1.bf16.xpose.msra.mxu0 0
    %428 = vmatprep.subr.bf16.mxu0 0
    %429 = vmatpush1.bf16.xpose.msra.mxu0 0
    %430 = vmatprep.subr.bf16.mxu0 0
    %431 = vmatpush1.bf16.xpose.msra.mxu0 0
    %432 = vmatprep.subr.bf16.mxu0 0
    %433 = vmatpush1.bf16.xpose.msra.mxu0 0
    %434 = vmatprep.subr.bf16.mxu0 0
    %435 = vmatpush1.bf16.xpose.msra.mxu0 0
    %436 = vmatprep.subr.bf16.mxu0 0
    %437 = vmatpush1.bf16.xpose.msra.mxu0 0
    %438 = vmatprep.subr.bf16.mxu0 0
    %439 = vmatpush1.bf16.xpose.msra.mxu0 0
    %440 = vmatprep.mubr.bf16.mxu0 0
    %441 = vmatmul.mubr.bf16.gmra.mrb[0].mxu0 %v403
    %v442 = vpop.f32.mrb[0].mxu0
    %v443 = vadd.f32 0.0, %v442
    %v444 = vpop.f32.mrb[0].mxu0
    %v445 = vpop.f32.mrb[0].mxu0
    %v446 = vpop.f32.mrb[0].mxu0
    %447 = vdwg.mxu0
    %449 = vrot.lane.b32.xlu0 %v296, 96
    %v450 = vpop.permute.xlu0 %449
    %v452 = vsel %vm66, %v296, 0
    %v455 = vsel %vm66, %v450, 0
    %457 = vmatprep.subr.bf16.mxu0 0
    %458 = vmatpush1.bf16.xpose.msra.mxu0 %v455
    %459 = vmatprep.subr.bf16.mxu0 0
    %460 = vmatpush1.bf16.xpose.msra.mxu0 0
    %461 = vmatprep.subr.bf16.mxu0 0
    %462 = vmatpush1.bf16.xpose.msra.mxu0 0
    %463 = vmatprep.subr.bf16.mxu0 0
    %464 = vmatpush1.bf16.xpose.msra.mxu0 0
    %465 = vmatprep.subr.bf16.mxu0 0
    %466 = vmatpush1.bf16.xpose.msra.mxu0 0
    %467 = vmatprep.subr.bf16.mxu0 0
    %468 = vmatpush1.bf16.xpose.msra.mxu0 0
    %469 = vmatprep.subr.bf16.mxu0 0
    %470 = vmatpush1.bf16.xpose.msra.mxu0 0
    %471 = vmatprep.subr.bf16.mxu0 0
    %472 = vmatpush1.bf16.xpose.msra.mxu0 0
    %473 = vmatprep.subr.bf16.mxu0 0
    %474 = vmatpush1.bf16.xpose.msra.mxu0 0
    %475 = vmatprep.subr.bf16.mxu0 0
    %476 = vmatpush1.bf16.xpose.msra.mxu0 0
    %477 = vmatprep.subr.bf16.mxu0 0
    %478 = vmatpush1.bf16.xpose.msra.mxu0 0
    %479 = vmatprep.subr.bf16.mxu0 0
    %480 = vmatpush1.bf16.xpose.msra.mxu0 0
    %481 = vmatprep.subr.bf16.mxu0 0
    %482 = vmatpush1.bf16.xpose.msra.mxu0 0
    %483 = vmatprep.subr.bf16.mxu0 0
    %484 = vmatpush1.bf16.xpose.msra.mxu0 0
    %485 = vmatprep.subr.bf16.mxu0 0
    %486 = vmatpush1.bf16.xpose.msra.mxu0 0
    %487 = vmatprep.subr.bf16.mxu0 0
    %488 = vmatpush1.bf16.xpose.msra.mxu0 0
    %489 = vmatprep.mubr.bf16.mxu0 0
    %490 = vmatmul.mubr.bf16.gmra.mrb[0].mxu0 %v452
    %v491 = vpop.f32.mrb[0].mxu0
    %v492 = vadd.f32 0.0, %v491
    %v493 = vpop.f32.mrb[0].mxu0
    %v494 = vpop.f32.mrb[0].mxu0
    %v495 = vpop.f32.mrb[0].mxu0
    %496 = vdwg.mxu0
    %498 = vrot.lane.b32.xlu0 %v297, 96
    %v499 = vpop.permute.xlu0 %498
    %v501 = vsel %vm66, %v297, 0
    %v504 = vsel %vm66, %v499, 0
    %506 = vmatprep.subr.bf16.mxu0 0
    %507 = vmatpush1.bf16.xpose.msra.mxu0 %v504
    %508 = vmatprep.subr.bf16.mxu0 0
    %509 = vmatpush1.bf16.xpose.msra.mxu0 0
    %510 = vmatprep.subr.bf16.mxu0 0
    %511 = vmatpush1.bf16.xpose.msra.mxu0 0
    %512 = vmatprep.subr.bf16.mxu0 0
    %513 = vmatpush1.bf16.xpose.msra.mxu0 0
    %514 = vmatprep.subr.bf16.mxu0 0
    %515 = vmatpush1.bf16.xpose.msra.mxu0 0
    %516 = vmatprep.subr.bf16.mxu0 0
    %517 = vmatpush1.bf16.xpose.msra.mxu0 0
    %518 = vmatprep.subr.bf16.mxu0 0
    %519 = vmatpush1.bf16.xpose.msra.mxu0 0
    %520 = vmatprep.subr.bf16.mxu0 0
    %521 = vmatpush1.bf16.xpose.msra.mxu0 0
    %522 = vmatprep.subr.bf16.mxu0 0
    %523 = vmatpush1.bf16.xpose.msra.mxu0 0
    %524 = vmatprep.subr.bf16.mxu0 0
    %525 = vmatpush1.bf16.xpose.msra.mxu0 0
    %526 = vmatprep.subr.bf16.mxu0 0
    %527 = vmatpush1.bf16.xpose.msra.mxu0 0
    %528 = vmatprep.subr.bf16.mxu0 0
    %529 = vmatpush1.bf16.xpose.msra.mxu0 0
    %530 = vmatprep.subr.bf16.mxu0 0
    %531 = vmatpush1.bf16.xpose.msra.mxu0 0
    %532 = vmatprep.subr.bf16.mxu0 0
    %533 = vmatpush1.bf16.xpose.msra.mxu0 0
    %534 = vmatprep.subr.bf16.mxu0 0
    %535 = vmatpush1.bf16.xpose.msra.mxu0 0
    %536 = vmatprep.subr.bf16.mxu0 0
    %537 = vmatpush1.bf16.xpose.msra.mxu0 0
    %538 = vmatprep.mubr.bf16.mxu0 0
    %539 = vmatmul.mubr.bf16.gmra.mrb[0].mxu0 %v501
    %v540 = vpop.f32.mrb[0].mxu0
    %v541 = vadd.f32 0.0, %v540
    %v542 = vpop.f32.mrb[0].mxu0
    %v543 = vpop.f32.mrb[0].mxu0
    %v544 = vpop.f32.mrb[0].mxu0
    %545 = vdwg.mxu0
    %547 = vrot.lane.b32.xlu0 %v298, 96
    %v548 = vpop.permute.xlu0 %547
    %v550 = vsel %vm66, %v298, 0
    %v553 = vsel %vm66, %v548, 0
    %555 = vmatprep.subr.bf16.mxu0 0
    %556 = vmatpush1.bf16.xpose.msra.mxu0 %v553
    %557 = vmatprep.subr.bf16.mxu0 0
    %558 = vmatpush1.bf16.xpose.msra.mxu0 0
    %559 = vmatprep.subr.bf16.mxu0 0
    %560 = vmatpush1.bf16.xpose.msra.mxu0 0
    %561 = vmatprep.subr.bf16.mxu0 0
    %562 = vmatpush1.bf16.xpose.msra.mxu0 0
    %563 = vmatprep.subr.bf16.mxu0 0
    %564 = vmatpush1.bf16.xpose.msra.mxu0 0
    %565 = vmatprep.subr.bf16.mxu0 0
    %566 = vmatpush1.bf16.xpose.msra.mxu0 0
    %567 = vmatprep.subr.bf16.mxu0 0
    %568 = vmatpush1.bf16.xpose.msra.mxu0 0
    %569 = vmatprep.subr.bf16.mxu0 0
    %570 = vmatpush1.bf16.xpose.msra.mxu0 0
    %571 = vmatprep.subr.bf16.mxu0 0
    %572 = vmatpush1.bf16.xpose.msra.mxu0 0
    %573 = vmatprep.subr.bf16.mxu0 0
    %574 = vmatpush1.bf16.xpose.msra.mxu0 0
    %575 = vmatprep.subr.bf16.mxu0 0
    %576 = vmatpush1.bf16.xpose.msra.mxu0 0
    %577 = vmatprep.subr.bf16.mxu0 0
    %578 = vmatpush1.bf16.xpose.msra.mxu0 0
    %579 = vmatprep.subr.bf16.mxu0 0
    %580 = vmatpush1.bf16.xpose.msra.mxu0 0
    %581 = vmatprep.subr.bf16.mxu0 0
    %582 = vmatpush1.bf16.xpose.msra.mxu0 0
    %583 = vmatprep.subr.bf16.mxu0 0
    %584 = vmatpush1.bf16.xpose.msra.mxu0 0
    %585 = vmatprep.subr.bf16.mxu0 0
    %586 = vmatpush1.bf16.xpose.msra.mxu0 0
    %587 = vmatprep.mubr.bf16.mxu0 0
    %588 = vmatmul.mubr.bf16.gmra.mrb[0].mxu0 %v550
    %v589 = vpop.f32.mrb[0].mxu0
    %v590 = vadd.f32 0.0, %v589
    %v591 = vpop.f32.mrb[0].mxu0
    %v592 = vpop.f32.mrb[0].mxu0
    %v593 = vpop.f32.mrb[0].mxu0
    %594 = vdwg.mxu0
    %596 = vrot.lane.b32.xlu0 %v299, 96
    %v597 = vpop.permute.xlu0 %596
    %v599 = vsel %vm66, %v299, 0
    %v602 = vsel %vm66, %v597, 0
    %604 = vmatprep.subr.bf16.mxu0 0
    %605 = vmatpush1.bf16.xpose.msra.mxu0 %v602
    %606 = vmatprep.subr.bf16.mxu0 0
    %607 = vmatpush1.bf16.xpose.msra.mxu0 0
    %608 = vmatprep.subr.bf16.mxu0 0
    %609 = vmatpush1.bf16.xpose.msra.mxu0 0
    %610 = vmatprep.subr.bf16.mxu0 0
    %611 = vmatpush1.bf16.xpose.msra.mxu0 0
    %612 = vmatprep.subr.bf16.mxu0 0
    %613 = vmatpush1.bf16.xpose.msra.mxu0 0
    %614 = vmatprep.subr.bf16.mxu0 0
    %615 = vmatpush1.bf16.xpose.msra.mxu0 0
    %616 = vmatprep.subr.bf16.mxu0 0
    %617 = vmatpush1.bf16.xpose.msra.mxu0 0
    %618 = vmatprep.subr.bf16.mxu0 0
    %619 = vmatpush1.bf16.xpose.msra.mxu0 0
    %620 = vmatprep.subr.bf16.mxu0 0
    %621 = vmatpush1.bf16.xpose.msra.mxu0 0
    %622 = vmatprep.subr.bf16.mxu0 0
    %623 = vmatpush1.bf16.xpose.msra.mxu0 0
    %624 = vmatprep.subr.bf16.mxu0 0
    %625 = vmatpush1.bf16.xpose.msra.mxu0 0
    %626 = vmatprep.subr.bf16.mxu0 0
    %627 = vmatpush1.bf16.xpose.msra.mxu0 0
    %628 = vmatprep.subr.bf16.mxu0 0
    %629 = vmatpush1.bf16.xpose.msra.mxu0 0
    %630 = vmatprep.subr.bf16.mxu0 0
    %631 = vmatpush1.bf16.xpose.msra.mxu0 0
    %632 = vmatprep.subr.bf16.mxu0 0
    %633 = vmatpush1.bf16.xpose.msra.mxu0 0
    %634 = vmatprep.subr.bf16.mxu0 0
    %635 = vmatpush1.bf16.xpose.msra.mxu0 0
    %636 = vmatprep.mubr.bf16.mxu0 0
    %637 = vmatmul.mubr.bf16.gmra.mrb[0].mxu0 %v599
    %v638 = vpop.f32.mrb[0].mxu0
    %v639 = vadd.f32 0.0, %v638
    %v640 = vpop.f32.mrb[0].mxu0
    %v641 = vpop.f32.mrb[0].mxu0
    %v642 = vpop.f32.mrb[0].mxu0
    %643 = vdwg.mxu0
    %645 = vrot.lane.b32.xlu0 %v300, 96
    %v646 = vpop.permute.xlu0 %645
    %v648 = vsel %vm66, %v300, 0
    %v651 = vsel %vm66, %v646, 0
    %653 = vmatprep.subr.bf16.mxu0 0
    %654 = vmatpush1.bf16.xpose.msra.mxu0 %v651
    %655 = vmatprep.subr.bf16.mxu0 0
    %656 = vmatpush1.bf16.xpose.msra.mxu0 0
    %657 = vmatprep.subr.bf16.mxu0 0
    %658 = vmatpush1.bf16.xpose.msra.mxu0 0
    %659 = vmatprep.subr.bf16.mxu0 0
    %660 = vmatpush1.bf16.xpose.msra.mxu0 0
    %661 = vmatprep.subr.bf16.mxu0 0
    %662 = vmatpush1.bf16.xpose.msra.mxu0 0
    %663 = vmatprep.subr.bf16.mxu0 0
    %664 = vmatpush1.bf16.xpose.msra.mxu0 0
    %665 = vmatprep.subr.bf16.mxu0 0
    %666 = vmatpush1.bf16.xpose.msra.mxu0 0
    %667 = vmatprep.subr.bf16.mxu0 0
    %668 = vmatpush1.bf16.xpose.msra.mxu0 0
    %669 = vmatprep.subr.bf16.mxu0 0
    %670 = vmatpush1.bf16.xpose.msra.mxu0 0
    %671 = vmatprep.subr.bf16.mxu0 0
    %672 = vmatpush1.bf16.xpose.msra.mxu0 0
    %673 = vmatprep.subr.bf16.mxu0 0
    %674 = vmatpush1.bf16.xpose.msra.mxu0 0
    %675 = vmatprep.subr.bf16.mxu0 0
    %676 = vmatpush1.bf16.xpose.msra.mxu0 0
    %677 = vmatprep.subr.bf16.mxu0 0
    %678 = vmatpush1.bf16.xpose.msra.mxu0 0
    %679 = vmatprep.subr.bf16.mxu0 0
    %680 = vmatpush1.bf16.xpose.msra.mxu0 0
    %681 = vmatprep.subr.bf16.mxu0 0
    %682 = vmatpush1.bf16.xpose.msra.mxu0 0
    %683 = vmatprep.subr.bf16.mxu0 0
    %684 = vmatpush1.bf16.xpose.msra.mxu0 0
    %685 = vmatprep.mubr.bf16.mxu0 0
    %686 = vmatmul.mubr.bf16.gmra.mrb[0].mxu0 %v648
    %v687 = vpop.f32.mrb[0].mxu0
    %v688 = vadd.f32 0.0, %v687
    %v689 = vpop.f32.mrb[0].mxu0
    %v690 = vpop.f32.mrb[0].mxu0
    %v691 = vpop.f32.mrb[0].mxu0
    %692 = vdwg.mxu0
    %v693 = vmul.f32 %v345, 0.17677669
    %v694 = vmul.f32 %v394, 0.17677669
    %v695 = vmul.f32 %v443, 0.17677669
    %v696 = vmul.f32 %v492, 0.17677669
    %v697 = vmul.f32 %v541, 0.17677669
    %v698 = vmul.f32 %v590, 0.17677669
    %v699 = vmul.f32 %v639, 0.17677669
    %v700 = vmul.f32 %v688, 0.17677669
    %vm701 = vcmask 64512
    %v702 = vsel %vm701, %v693, -inf
    %703 = vmax.xlane.f32.xlu0 %v702
    %v704 = vpop.xlane.xlu0 %703
    %v705 = vsel %vm701, %v694, -inf
    %706 = vmax.xlane.f32.xlu0 %v705
    %v707 = vpop.xlane.xlu0 %706
    %v708 = vsel %vm701, %v695, -inf
    %709 = vmax.xlane.f32.xlu0 %v708
    %v710 = vpop.xlane.xlu0 %709
    %v711 = vsel %vm701, %v696, -inf
    %712 = vmax.xlane.f32.xlu0 %v711
    %v713 = vpop.xlane.xlu0 %712
    %v714 = vsel %vm701, %v697, -inf
    %715 = vmax.xlane.f32.xlu0 %v714
    %v716 = vpop.xlane.xlu0 %715
    %v717 = vsel %vm701, %v698, -inf
    %718 = vmax.xlane.f32.xlu0 %v717
    %v719 = vpop.xlane.xlu0 %718
    %v720 = vsel %vm701, %v699, -inf
    %721 = vmax.xlane.f32.xlu0 %v720
    %v722 = vpop.xlane.xlu0 %721
    %v723 = vsel %vm701, %v700, -inf
    %724 = vmax.xlane.f32.xlu0 %v723
    %v725 = vpop.xlane.xlu0 %724
    %v726 = vsub.f32 %v693, %v704
    %v727 = vsub.f32 %v694, %v707
    %v728 = vsub.f32 %v695, %v710
    %v729 = vsub.f32 %v696, %v713
    %v730 = vsub.f32 %v697, %v716
    %v731 = vsub.f32 %v698, %v719
    %v732 = vsub.f32 %v699, %v722
    %v733 = vsub.f32 %v700, %v725
    %v734 = vmul.f32 %v726, 1.442695
    %v735 = vpow.pop %v734
    %v736 = vmul.f32 %v727, 1.442695
    %v737 = vpow.pop %v736
    %v738 = vmul.f32 %v728, 1.442695
    %v739 = vpow.pop %v738
    %v740 = vmul.f32 %v729, 1.442695
    %v741 = vpow.pop %v740
    %v742 = vmul.f32 %v730, 1.442695
    %v743 = vpow.pop %v742
    %v744 = vmul.f32 %v731, 1.442695
    %v745 = vpow.pop %v744
    %v746 = vmul.f32 %v732, 1.442695
    %v747 = vpow.pop %v746
    %v748 = vmul.f32 %v733, 1.442695
    %v749 = vpow.pop %v748
    %v750 = vsel %vm701, %v735, 0.0
    %751 = vadd.xlane.f32.xlu0 %v750
    %v752 = vpop.xlane.xlu0 %751
    %v753 = vsel %vm701, %v737, 0.0
    %754 = vadd.xlane.f32.xlu0 %v753
    %v755 = vpop.xlane.xlu0 %754
    %v756 = vsel %vm701, %v739, 0.0
    %757 = vadd.xlane.f32.xlu0 %v756
    %v758 = vpop.xlane.xlu0 %757
    %v759 = vsel %vm701, %v741, 0.0
    %760 = vadd.xlane.f32.xlu0 %v759
    %v761 = vpop.xlane.xlu0 %760
    %v762 = vsel %vm701, %v743, 0.0
    %763 = vadd.xlane.f32.xlu0 %v762
    %v764 = vpop.xlane.xlu0 %763
    %v765 = vsel %vm701, %v745, 0.0
    %766 = vadd.xlane.f32.xlu0 %v765
    %v767 = vpop.xlane.xlu0 %766
    %v768 = vsel %vm701, %v747, 0.0
    %769 = vadd.xlane.f32.xlu0 %v768
    %v770 = vpop.xlane.xlu0 %769
    %v771 = vsel %vm701, %v749, 0.0
    %772 = vadd.xlane.f32.xlu0 %v771
    %v773 = vpop.xlane.xlu0 %772
    %v774 = vrcp.pop %v752
    %v775 = vrcp.pop %v755
    %v776 = vrcp.pop %v758
    %v777 = vrcp.pop %v761
    %v778 = vrcp.pop %v764
    %v779 = vrcp.pop %v767
    %v780 = vrcp.pop %v770
    %v781 = vrcp.pop %v773
    %v782 = vmul.f32 %v735, %v774
    %v783 = vmul.f32 %v737, %v775
    %v784 = vmul.f32 %v739, %v776
    %v785 = vmul.f32 %v741, %v777
    %v786 = vmul.f32 %v743, %v778
    %v787 = vmul.f32 %v745, %v779
    %v788 = vmul.f32 %v747, %v780
    %v789 = vmul.f32 %v749, %v781
    %v790 = vpack.c.bf16 %v782, %v782
    %v791 = vpack.c.bf16 %v783, %v783
    %v792 = vpack.c.bf16 %v784, %v784
    %v793 = vpack.c.bf16 %v785, %v785
    %v794 = vpack.c.bf16 %v786, %v786
    %v795 = vpack.c.bf16 %v787, %v787
    %v796 = vpack.c.bf16 %v788, %v788
    %v797 = vpack.c.bf16 %v789, %v789
    %798 = vrot.lane.b32.xlu0 %v293, 64
    %v799 = vpop.permute.xlu0 %798
    %v801 = vsel %vm701, %v790, 0
    %vm803 = vcmask 1043456
    %v805 = vsel %vm803, %v799, 0
    %807 = vmatprep.subr.bf16.mxu0 0
    %808 = vmatpush1.bf16.msra.mxu0 %v805
    %809 = vmatprep.subr.bf16.mxu0 0
    %810 = vmatpush1.bf16.msra.mxu0 0
    %811 = vmatprep.subr.bf16.mxu0 0
    %812 = vmatpush1.bf16.msra.mxu0 0
    %813 = vmatprep.subr.bf16.mxu0 0
    %814 = vmatpush1.bf16.msra.mxu0 0
    %815 = vmatprep.subr.bf16.mxu0 0
    %816 = vmatpush1.bf16.msra.mxu0 0
    %817 = vmatprep.subr.bf16.mxu0 0
    %818 = vmatpush1.bf16.msra.mxu0 0
    %819 = vmatprep.subr.bf16.mxu0 0
    %820 = vmatpush1.bf16.msra.mxu0 0
    %821 = vmatprep.subr.bf16.mxu0 0
    %822 = vmatpush1.bf16.msra.mxu0 0
    %823 = vmatprep.subr.bf16.mxu0 0
    %824 = vmatpush1.bf16.msra.mxu0 0
    %825 = vmatprep.subr.bf16.mxu0 0
    %826 = vmatpush1.bf16.msra.mxu0 0
    %827 = vmatprep.subr.bf16.mxu0 0
    %828 = vmatpush1.bf16.msra.mxu0 0
    %829 = vmatprep.subr.bf16.mxu0 0
    %830 = vmatpush1.bf16.msra.mxu0 0
    %831 = vmatprep.subr.bf16.mxu0 0
    %832 = vmatpush1.bf16.msra.mxu0 0
    %833 = vmatprep.subr.bf16.mxu0 0
    %834 = vmatpush1.bf16.msra.mxu0 0
    %835 = vmatprep.subr.bf16.mxu0 0
    %836 = vmatpush1.bf16.msra.mxu0 0
    %837 = vmatprep.subr.bf16.mxu0 0
    %838 = vmatpush1.bf16.msra.mxu0 0
    %839 = vmatprep.mubr.bf16.mxu0 0
    %840 = vmatmul.mubr.bf16.gmra.mrb[0].mxu0 %v801
    %v841 = vpop.f32.mrb[0].mxu0
    %v842 = vadd.f32 0.0, %v841
    %v843 = vpop.f32.mrb[0].mxu0
    %v844 = vpop.f32.mrb[0].mxu0
    %v845 = vpop.f32.mrb[0].mxu0
    %846 = vdwg.mxu0
    %847 = vrot.lane.b32.xlu0 %v294, 64
    %v848 = vpop.permute.xlu0 %847
    %v850 = vsel %vm701, %v791, 0
    %v853 = vsel %vm803, %v848, 0
    %855 = vmatprep.subr.bf16.mxu0 0
    %856 = vmatpush1.bf16.msra.mxu0 %v853
    %857 = vmatprep.subr.bf16.mxu0 0
    %858 = vmatpush1.bf16.msra.mxu0 0
    %859 = vmatprep.subr.bf16.mxu0 0
    %860 = vmatpush1.bf16.msra.mxu0 0
    %861 = vmatprep.subr.bf16.mxu0 0
    %862 = vmatpush1.bf16.msra.mxu0 0
    %863 = vmatprep.subr.bf16.mxu0 0
    %864 = vmatpush1.bf16.msra.mxu0 0
    %865 = vmatprep.subr.bf16.mxu0 0
    %866 = vmatpush1.bf16.msra.mxu0 0
    %867 = vmatprep.subr.bf16.mxu0 0
    %868 = vmatpush1.bf16.msra.mxu0 0
    %869 = vmatprep.subr.bf16.mxu0 0
    %870 = vmatpush1.bf16.msra.mxu0 0
    %871 = vmatprep.subr.bf16.mxu0 0
    %872 = vmatpush1.bf16.msra.mxu0 0
    %873 = vmatprep.subr.bf16.mxu0 0
    %874 = vmatpush1.bf16.msra.mxu0 0
    %875 = vmatprep.subr.bf16.mxu0 0
    %876 = vmatpush1.bf16.msra.mxu0 0
    %877 = vmatprep.subr.bf16.mxu0 0
    %878 = vmatpush1.bf16.msra.mxu0 0
    %879 = vmatprep.subr.bf16.mxu0 0
    %880 = vmatpush1.bf16.msra.mxu0 0
    %881 = vmatprep.subr.bf16.mxu0 0
    %882 = vmatpush1.bf16.msra.mxu0 0
    %883 = vmatprep.subr.bf16.mxu0 0
    %884 = vmatpush1.bf16.msra.mxu0 0
    %885 = vmatprep.subr.bf16.mxu0 0
    %886 = vmatpush1.bf16.msra.mxu0 0
    %887 = vmatprep.mubr.bf16.mxu0 0
    %888 = vmatmul.mubr.bf16.gmra.mrb[0].mxu0 %v850
    %v889 = vpop.f32.mrb[0].mxu0
    %v890 = vadd.f32 0.0, %v889
    %v891 = vpop.f32.mrb[0].mxu0
    %v892 = vpop.f32.mrb[0].mxu0
    %v893 = vpop.f32.mrb[0].mxu0
    %894 = vdwg.mxu0
    %895 = vrot.lane.b32.xlu0 %v295, 64
    %v896 = vpop.permute.xlu0 %895
    %v898 = vsel %vm701, %v792, 0
    %v901 = vsel %vm803, %v896, 0
    %903 = vmatprep.subr.bf16.mxu0 0
    %904 = vmatpush1.bf16.msra.mxu0 %v901
    %905 = vmatprep.subr.bf16.mxu0 0
    %906 = vmatpush1.bf16.msra.mxu0 0
    %907 = vmatprep.subr.bf16.mxu0 0
    %908 = vmatpush1.bf16.msra.mxu0 0
    %909 = vmatprep.subr.bf16.mxu0 0
    %910 = vmatpush1.bf16.msra.mxu0 0
    %911 = vmatprep.subr.bf16.mxu0 0
    %912 = vmatpush1.bf16.msra.mxu0 0
    %913 = vmatprep.subr.bf16.mxu0 0
    %914 = vmatpush1.bf16.msra.mxu0 0
    %915 = vmatprep.subr.bf16.mxu0 0
    %916 = vmatpush1.bf16.msra.mxu0 0
    %917 = vmatprep.subr.bf16.mxu0 0
    %918 = vmatpush1.bf16.msra.mxu0 0
    %919 = vmatprep.subr.bf16.mxu0 0
    %920 = vmatpush1.bf16.msra.mxu0 0
    %921 = vmatprep.subr.bf16.mxu0 0
    %922 = vmatpush1.bf16.msra.mxu0 0
    %923 = vmatprep.subr.bf16.mxu0 0
    %924 = vmatpush1.bf16.msra.mxu0 0
    %925 = vmatprep.subr.bf16.mxu0 0
    %926 = vmatpush1.bf16.msra.mxu0 0
    %927 = vmatprep.subr.bf16.mxu0 0
    %928 = vmatpush1.bf16.msra.mxu0 0
    %929 = vmatprep.subr.bf16.mxu0 0
    %930 = vmatpush1.bf16.msra.mxu0 0
    %931 = vmatprep.subr.bf16.mxu0 0
    %932 = vmatpush1.bf16.msra.mxu0 0
    %933 = vmatprep.subr.bf16.mxu0 0
    %934 = vmatpush1.bf16.msra.mxu0 0
    %935 = vmatprep.mubr.bf16.mxu0 0
    %936 = vmatmul.mubr.bf16.gmra.mrb[0].mxu0 %v898
    %v937 = vpop.f32.mrb[0].mxu0
    %v938 = vadd.f32 0.0, %v937
    %v939 = vpop.f32.mrb[0].mxu0
    %v940 = vpop.f32.mrb[0].mxu0
    %v941 = vpop.f32.mrb[0].mxu0
    %942 = vdwg.mxu0
    %943 = vrot.lane.b32.xlu0 %v296, 64
    %v944 = vpop.permute.xlu0 %943
    %v946 = vsel %vm701, %v793, 0
    %v949 = vsel %vm803, %v944, 0
    %951 = vmatprep.subr.bf16.mxu0 0
    %952 = vmatpush1.bf16.msra.mxu0 %v949
    %953 = vmatprep.subr.bf16.mxu0 0
    %954 = vmatpush1.bf16.msra.mxu0 0
    %955 = vmatprep.subr.bf16.mxu0 0
    %956 = vmatpush1.bf16.msra.mxu0 0
    %957 = vmatprep.subr.bf16.mxu0 0
    %958 = vmatpush1.bf16.msra.mxu0 0
    %959 = vmatprep.subr.bf16.mxu0 0
    %960 = vmatpush1.bf16.msra.mxu0 0
    %961 = vmatprep.subr.bf16.mxu0 0
    %962 = vmatpush1.bf16.msra.mxu0 0
    %963 = vmatprep.subr.bf16.mxu0 0
    %964 = vmatpush1.bf16.msra.mxu0 0
    %965 = vmatprep.subr.bf16.mxu0 0
    %966 = vmatpush1.bf16.msra.mxu0 0
    %967 = vmatprep.subr.bf16.mxu0 0
    %968 = vmatpush1.bf16.msra.mxu0 0
    %969 = vmatprep.subr.bf16.mxu0 0
    %970 = vmatpush1.bf16.msra.mxu0 0
    %971 = vmatprep.subr.bf16.mxu0 0
    %972 = vmatpush1.bf16.msra.mxu0 0
    %973 = vmatprep.subr.bf16.mxu0 0
    %974 = vmatpush1.bf16.msra.mxu0 0
    %975 = vmatprep.subr.bf16.mxu0 0
    %976 = vmatpush1.bf16.msra.mxu0 0
    %977 = vmatprep.subr.bf16.mxu0 0
    %978 = vmatpush1.bf16.msra.mxu0 0
    %979 = vmatprep.subr.bf16.mxu0 0
    %980 = vmatpush1.bf16.msra.mxu0 0
    %981 = vmatprep.subr.bf16.mxu0 0
    %982 = vmatpush1.bf16.msra.mxu0 0
    %983 = vmatprep.mubr.bf16.mxu0 0
    %984 = vmatmul.mubr.bf16.gmra.mrb[0].mxu0 %v946
    %v985 = vpop.f32.mrb[0].mxu0
    %v986 = vadd.f32 0.0, %v985
    %v987 = vpop.f32.mrb[0].mxu0
    %v988 = vpop.f32.mrb[0].mxu0
    %v989 = vpop.f32.mrb[0].mxu0
    %990 = vdwg.mxu0
    %991 = vrot.lane.b32.xlu0 %v297, 64
    %v992 = vpop.permute.xlu0 %991
    %v994 = vsel %vm701, %v794, 0
    %v997 = vsel %vm803, %v992, 0
    %999 = vmatprep.subr.bf16.mxu0 0
    %1000 = vmatpush1.bf16.msra.mxu0 %v997
    %1001 = vmatprep.subr.bf16.mxu0 0
    %1002 = vmatpush1.bf16.msra.mxu0 0
    %1003 = vmatprep.subr.bf16.mxu0 0
    %1004 = vmatpush1.bf16.msra.mxu0 0
    %1005 = vmatprep.subr.bf16.mxu0 0
    %1006 = vmatpush1.bf16.msra.mxu0 0
    %1007 = vmatprep.subr.bf16.mxu0 0
    %1008 = vmatpush1.bf16.msra.mxu0 0
    %1009 = vmatprep.subr.bf16.mxu0 0
    %1010 = vmatpush1.bf16.msra.mxu0 0
    %1011 = vmatprep.subr.bf16.mxu0 0
    %1012 = vmatpush1.bf16.msra.mxu0 0
    %1013 = vmatprep.subr.bf16.mxu0 0
    %1014 = vmatpush1.bf16.msra.mxu0 0
    %1015 = vmatprep.subr.bf16.mxu0 0
    %1016 = vmatpush1.bf16.msra.mxu0 0
    %1017 = vmatprep.subr.bf16.mxu0 0
    %1018 = vmatpush1.bf16.msra.mxu0 0
    %1019 = vmatprep.subr.bf16.mxu0 0
    %1020 = vmatpush1.bf16.msra.mxu0 0
    %1021 = vmatprep.subr.bf16.mxu0 0
    %1022 = vmatpush1.bf16.msra.mxu0 0
    %1023 = vmatprep.subr.bf16.mxu0 0
    %1024 = vmatpush1.bf16.msra.mxu0 0
    %1025 = vmatprep.subr.bf16.mxu0 0
    %1026 = vmatpush1.bf16.msra.mxu0 0
    %1027 = vmatprep.subr.bf16.mxu0 0
    %1028 = vmatpush1.bf16.msra.mxu0 0
    %1029 = vmatprep.subr.bf16.mxu0 0
    %1030 = vmatpush1.bf16.msra.mxu0 0
    %1031 = vmatprep.mubr.bf16.mxu0 0
    %1032 = vmatmul.mubr.bf16.gmra.mrb[0].mxu0 %v994
    %v1033 = vpop.f32.mrb[0].mxu0
    %v1034 = vadd.f32 0.0, %v1033
    %v1035 = vpop.f32.mrb[0].mxu0
    %v1036 = vpop.f32.mrb[0].mxu0
    %v1037 = vpop.f32.mrb[0].mxu0
    %1038 = vdwg.mxu0
    %1039 = vrot.lane.b32.xlu0 %v298, 64
    %v1040 = vpop.permute.xlu0 %1039
    %v1042 = vsel %vm701, %v795, 0
    %v1045 = vsel %vm803, %v1040, 0
    %1047 = vmatprep.subr.bf16.mxu0 0
    %1048 = vmatpush1.bf16.msra.mxu0 %v1045
    %1049 = vmatprep.subr.bf16.mxu0 0
    %1050 = vmatpush1.bf16.msra.mxu0 0
    %1051 = vmatprep.subr.bf16.mxu0 0
    %1052 = vmatpush1.bf16.msra.mxu0 0
    %1053 = vmatprep.subr.bf16.mxu0 0
    %1054 = vmatpush1.bf16.msra.mxu0 0
    %1055 = vmatprep.subr.bf16.mxu0 0
    %1056 = vmatpush1.bf16.msra.mxu0 0
    %1057 = vmatprep.subr.bf16.mxu0 0
    %1058 = vmatpush1.bf16.msra.mxu0 0
    %1059 = vmatprep.subr.bf16.mxu0 0
    %1060 = vmatpush1.bf16.msra.mxu0 0
    %1061 = vmatprep.subr.bf16.mxu0 0
    %1062 = vmatpush1.bf16.msra.mxu0 0
    %1063 = vmatprep.subr.bf16.mxu0 0
    %1064 = vmatpush1.bf16.msra.mxu0 0
    %1065 = vmatprep.subr.bf16.mxu0 0
    %1066 = vmatpush1.bf16.msra.mxu0 0
    %1067 = vmatprep.subr.bf16.mxu0 0
    %1068 = vmatpush1.bf16.msra.mxu0 0
    %1069 = vmatprep.subr.bf16.mxu0 0
    %1070 = vmatpush1.bf16.msra.mxu0 0
    %1071 = vmatprep.subr.bf16.mxu0 0
    %1072 = vmatpush1.bf16.msra.mxu0 0
    %1073 = vmatprep.subr.bf16.mxu0 0
    %1074 = vmatpush1.bf16.msra.mxu0 0
    %1075 = vmatprep.subr.bf16.mxu0 0
    %1076 = vmatpush1.bf16.msra.mxu0 0
    %1077 = vmatprep.subr.bf16.mxu0 0
    %1078 = vmatpush1.bf16.msra.mxu0 0
    %1079 = vmatprep.mubr.bf16.mxu0 0
    %1080 = vmatmul.mubr.bf16.gmra.mrb[0].mxu0 %v1042
    %v1081 = vpop.f32.mrb[0].mxu0
    %v1082 = vadd.f32 0.0, %v1081
    %v1083 = vpop.f32.mrb[0].mxu0
    %v1084 = vpop.f32.mrb[0].mxu0
    %v1085 = vpop.f32.mrb[0].mxu0
    %1086 = vdwg.mxu0
    %1087 = vrot.lane.b32.xlu0 %v299, 64
    %v1088 = vpop.permute.xlu0 %1087
    %v1090 = vsel %vm701, %v796, 0
    %v1093 = vsel %vm803, %v1088, 0
    %1095 = vmatprep.subr.bf16.mxu0 0
    %1096 = vmatpush1.bf16.msra.mxu0 %v1093
    %1097 = vmatprep.subr.bf16.mxu0 0
    %1098 = vmatpush1.bf16.msra.mxu0 0
    %1099 = vmatprep.subr.bf16.mxu0 0
    %1100 = vmatpush1.bf16.msra.mxu0 0
    %1101 = vmatprep.subr.bf16.mxu0 0
    %1102 = vmatpush1.bf16.msra.mxu0 0
    %1103 = vmatprep.subr.bf16.mxu0 0
    %1104 = vmatpush1.bf16.msra.mxu0 0
    %1105 = vmatprep.subr.bf16.mxu0 0
    %1106 = vmatpush1.bf16.msra.mxu0 0
    %1107 = vmatprep.subr.bf16.mxu0 0
    %1108 = vmatpush1.bf16.msra.mxu0 0
    %1109 = vmatprep.subr.bf16.mxu0 0
    %1110 = vmatpush1.bf16.msra.mxu0 0
    %1111 = vmatprep.subr.bf16.mxu0 0
    %1112 = vmatpush1.bf16.msra.mxu0 0
    %1113 = vmatprep.subr.bf16.mxu0 0
    %1114 = vmatpush1.bf16.msra.mxu0 0
    %1115 = vmatprep.subr.bf16.mxu0 0
    %1116 = vmatpush1.bf16.msra.mxu0 0
    %1117 = vmatprep.subr.bf16.mxu0 0
    %1118 = vmatpush1.bf16.msra.mxu0 0
    %1119 = vmatprep.subr.bf16.mxu0 0
    %1120 = vmatpush1.bf16.msra.mxu0 0
    %1121 = vmatprep.subr.bf16.mxu0 0
    %1122 = vmatpush1.bf16.msra.mxu0 0
    %1123 = vmatprep.subr.bf16.mxu0 0
    %1124 = vmatpush1.bf16.msra.mxu0 0
    %1125 = vmatprep.subr.bf16.mxu0 0
    %1126 = vmatpush1.bf16.msra.mxu0 0
    %1127 = vmatprep.mubr.bf16.mxu0 0
    %1128 = vmatmul.mubr.bf16.gmra.mrb[0].mxu0 %v1090
    %v1129 = vpop.f32.mrb[0].mxu0
    %v1130 = vadd.f32 0.0, %v1129
    %v1131 = vpop.f32.mrb[0].mxu0
    %v1132 = vpop.f32.mrb[0].mxu0
    %v1133 = vpop.f32.mrb[0].mxu0
    %1134 = vdwg.mxu0
    %1135 = vrot.lane.b32.xlu0 %v300, 64
    %v1136 = vpop.permute.xlu0 %1135
    %v1138 = vsel %vm701, %v797, 0
    %v1141 = vsel %vm803, %v1136, 0
    %1143 = vmatprep.subr.bf16.mxu0 0
    %1144 = vmatpush1.bf16.msra.mxu0 %v1141
    %1145 = vmatprep.subr.bf16.mxu0 0
    %1146 = vmatpush1.bf16.msra.mxu0 0
    %1147 = vmatprep.subr.bf16.mxu0 0
    %1148 = vmatpush1.bf16.msra.mxu0 0
    %1149 = vmatprep.subr.bf16.mxu0 0
    %1150 = vmatpush1.bf16.msra.mxu0 0
    %1151 = vmatprep.subr.bf16.mxu0 0
    %1152 = vmatpush1.bf16.msra.mxu0 0
    %1153 = vmatprep.subr.bf16.mxu0 0
    %1154 = vmatpush1.bf16.msra.mxu0 0
    %1155 = vmatprep.subr.bf16.mxu0 0
    %1156 = vmatpush1.bf16.msra.mxu0 0
    %1157 = vmatprep.subr.bf16.mxu0 0
    %1158 = vmatpush1.bf16.msra.mxu0 0
    %1159 = vmatprep.subr.bf16.mxu0 0
    %1160 = vmatpush1.bf16.msra.mxu0 0
    %1161 = vmatprep.subr.bf16.mxu0 0
    %1162 = vmatpush1.bf16.msra.mxu0 0
    %1163 = vmatprep.subr.bf16.mxu0 0
    %1164 = vmatpush1.bf16.msra.mxu0 0
    %1165 = vmatprep.subr.bf16.mxu0 0
    %1166 = vmatpush1.bf16.msra.mxu0 0
    %1167 = vmatprep.subr.bf16.mxu0 0
    %1168 = vmatpush1.bf16.msra.mxu0 0
    %1169 = vmatprep.subr.bf16.mxu0 0
    %1170 = vmatpush1.bf16.msra.mxu0 0
    %1171 = vmatprep.subr.bf16.mxu0 0
    %1172 = vmatpush1.bf16.msra.mxu0 0
    %1173 = vmatprep.subr.bf16.mxu0 0
    %1174 = vmatpush1.bf16.msra.mxu0 0
    %1175 = vmatprep.mubr.bf16.mxu0 0
    %1176 = vmatmul.mubr.bf16.gmra.mrb[0].mxu0 %v1138
    %v1177 = vpop.f32.mrb[0].mxu0
    %v1178 = vadd.f32 0.0, %v1177
    %v1179 = vpop.f32.mrb[0].mxu0
    %v1180 = vpop.f32.mrb[0].mxu0
    %v1181 = vpop.f32.mrb[0].mxu0
    %1182 = vdwg.mxu0
    %v1183 = vadd.f32 %v58, %v842
    %v1184 = vadd.f32 %v59, %v890
    %v1185 = vadd.f32 %v60, %v938
    %v1186 = vadd.f32 %v61, %v986
    %v1187 = vadd.f32 %v62, %v1034
    %v1188 = vadd.f32 %v63, %v1082
    %v1189 = vadd.f32 %v64, %v1130
    %v1190 = vadd.f32 %v65, %v1178
    %v1191 = vsel %vm66, %v1183, 0.0
    %1192 = vadd.xlane.f32.xlu0 %v1191
    %v1193 = vpop.xlane.xlu0 %1192
    %v1194 = vsel %vm66, %v1184, 0.0
    %1195 = vadd.xlane.f32.xlu0 %v1194
    %v1196 = vpop.xlane.xlu0 %1195
    %v1197 = vsel %vm66, %v1185, 0.0
    %1198 = vadd.xlane.f32.xlu0 %v1197
    %v1199 = vpop.xlane.xlu0 %1198
    %v1200 = vsel %vm66, %v1186, 0.0
    %1201 = vadd.xlane.f32.xlu0 %v1200
    %v1202 = vpop.xlane.xlu0 %1201
    %v1203 = vsel %vm66, %v1187, 0.0
    %1204 = vadd.xlane.f32.xlu0 %v1203
    %v1205 = vpop.xlane.xlu0 %1204
    %v1206 = vsel %vm66, %v1188, 0.0
    %1207 = vadd.xlane.f32.xlu0 %v1206
    %v1208 = vpop.xlane.xlu0 %1207
    %v1209 = vsel %vm66, %v1189, 0.0
    %1210 = vadd.xlane.f32.xlu0 %v1209
    %v1211 = vpop.xlane.xlu0 %1210
    %v1212 = vsel %vm66, %v1190, 0.0
    %1213 = vadd.xlane.f32.xlu0 %v1212
    %v1214 = vpop.xlane.xlu0 %1213
    %v1215 = vmul.f32 %v1193, %v91
    %v1216 = vmul.f32 %v1196, %v91
    %v1217 = vmul.f32 %v1199, %v91
    %v1218 = vmul.f32 %v1202, %v91
    %v1219 = vmul.f32 %v1205, %v91
    %v1220 = vmul.f32 %v1208, %v91
    %v1221 = vmul.f32 %v1211, %v91
    %v1222 = vmul.f32 %v1214, %v91
    %v1223 = vsub.f32 %v1183, %v1215
    %v1224 = vsub.f32 %v1184, %v1216
    %v1225 = vsub.f32 %v1185, %v1217
    %v1226 = vsub.f32 %v1186, %v1218
    %v1227 = vsub.f32 %v1187, %v1219
    %v1228 = vsub.f32 %v1188, %v1220
    %v1229 = vsub.f32 %v1189, %v1221
    %v1230 = vsub.f32 %v1190, %v1222
    %v1231 = vmul.f32 %v1223, %v1223
    %v1232 = vmul.f32 %v1224, %v1224
    %v1233 = vmul.f32 %v1225, %v1225
    %v1234 = vmul.f32 %v1226, %v1226
    %v1235 = vmul.f32 %v1227, %v1227
    %v1236 = vmul.f32 %v1228, %v1228
    %v1237 = vmul.f32 %v1229, %v1229
    %v1238 = vmul.f32 %v1230, %v1230
    %v1239 = vsel %vm66, %v1231, 0.0
    %1240 = vadd.xlane.f32.xlu0 %v1239
    %v1241 = vpop.xlane.xlu0 %1240
    %v1242 = vsel %vm66, %v1232, 0.0
    %1243 = vadd.xlane.f32.xlu0 %v1242
    %v1244 = vpop.xlane.xlu0 %1243
    %v1245 = vsel %vm66, %v1233, 0.0
    %1246 = vadd.xlane.f32.xlu0 %v1245
    %v1247 = vpop.xlane.xlu0 %1246
    %v1248 = vsel %vm66, %v1234, 0.0
    %1249 = vadd.xlane.f32.xlu0 %v1248
    %v1250 = vpop.xlane.xlu0 %1249
    %v1251 = vsel %vm66, %v1235, 0.0
    %1252 = vadd.xlane.f32.xlu0 %v1251
    %v1253 = vpop.xlane.xlu0 %1252
    %v1254 = vsel %vm66, %v1236, 0.0
    %1255 = vadd.xlane.f32.xlu0 %v1254
    %v1256 = vpop.xlane.xlu0 %1255
    %v1257 = vsel %vm66, %v1237, 0.0
    %1258 = vadd.xlane.f32.xlu0 %v1257
    %v1259 = vpop.xlane.xlu0 %1258
    %v1260 = vsel %vm66, %v1238, 0.0
    %1261 = vadd.xlane.f32.xlu0 %v1260
    %v1262 = vpop.xlane.xlu0 %1261
    %v1263 = vmul.f32 %v1241, %v91
    %v1264 = vmul.f32 %v1244, %v91
    %v1265 = vmul.f32 %v1247, %v91
    %v1266 = vmul.f32 %v1250, %v91
    %v1267 = vmul.f32 %v1253, %v91
    %v1268 = vmul.f32 %v1256, %v91
    %v1269 = vmul.f32 %v1259, %v91
    %v1270 = vmul.f32 %v1262, %v91
    %v1271 = vadd.f32 %v1263, 1e-05
    %v1272 = vadd.f32 %v1264, 1e-05
    %v1273 = vadd.f32 %v1265, 1e-05
    %v1274 = vadd.f32 %v1266, 1e-05
    %v1275 = vadd.f32 %v1267, 1e-05
    %v1276 = vadd.f32 %v1268, 1e-05
    %v1277 = vadd.f32 %v1269, 1e-05
    %v1278 = vadd.f32 %v1270, 1e-05
    %v1279 = vrsqrt.pop %v1271
    %v1280 = vrsqrt.pop %v1272
    %v1281 = vrsqrt.pop %v1273
    %v1282 = vrsqrt.pop %v1274
    %v1283 = vrsqrt.pop %v1275
    %v1284 = vrsqrt.pop %v1276
    %v1285 = vrsqrt.pop %v1277
    %v1286 = vrsqrt.pop %v1278
    %v1287 = vmul.f32 %v1223, %v1279
    %v1288 = vmul.f32 %v1224, %v1280
    %v1289 = vmul.f32 %v1225, %v1281
    %v1290 = vmul.f32 %v1226, %v1282
    %v1291 = vmul.f32 %v1227, %v1283
    %v1292 = vmul.f32 %v1228, %v1284
    %v1293 = vmul.f32 %v1229, %v1285
    %v1294 = vmul.f32 %v1230, %v1286
    %v1295 = vlaneseq
    %v1296 = vshrl.u32 %v1295, 7
    %v1297 = vsub.s32 0, %v1296
    %v1298 = vrot.slane %v53, %v1297
    %v1299 = vmul.f32 %v1287, %v1298
    %v1300 = vmul.f32 %v1288, %v1298
    %v1301 = vmul.f32 %v1289, %v1298
    %v1302 = vmul.f32 %v1290, %v1298
    %v1303 = vmul.f32 %v1291, %v1298
    %v1304 = vmul.f32 %v1292, %v1298
    %v1305 = vmul.f32 %v1293, %v1298
    %v1306 = vmul.f32 %v1294, %v1298
    %v1307 = vlaneseq
    %v1308 = vshrl.u32 %v1307, 7
    %v1309 = vsub.s32 0, %v1308
    %v1310 = vrot.slane %v54, %v1309
    %v1311 = vadd.f32 %v1299, %v1310
    %v1312 = vadd.f32 %v1300, %v1310
    %v1313 = vadd.f32 %v1301, %v1310
    %v1314 = vadd.f32 %v1302, %v1310
    %v1315 = vadd.f32 %v1303, %v1310
    %v1316 = vadd.f32 %v1304, %v1310
    %v1317 = vadd.f32 %v1305, %v1310
    %v1318 = vadd.f32 %v1306, %v1310
    %v1319 = vpack.c.bf16 %v1312, %v1311
    %v1320 = vpack.c.bf16 %v1314, %v1313
    %v1321 = vpack.c.bf16 %v1316, %v1315
    %v1322 = vpack.c.bf16 %v1318, %v1317
    %v1323 = vld [vmem:[#allocation5] sm:$0xf]
    %v1324 = vld [vmem:[#allocation5 + $0x4] sm:$0xf]
    %v1325 = vld [vmem:[#allocation5 + $0x8] sm:$0xf]
    %v1326 = vld [vmem:[#allocation5 + $0xc] sm:$0xf]
    %v1327 = vlaneseq
    %v1328 = vshrl.u32 %v1327, 7
    %v1329 = vsub.s32 0, %v1328
    %v1330 = vrot.slane %v55, %v1329
    %v1335 = vunpack.c.l.b16 %v1323
    %v1336 = vunpack.c.l.b16 %v1324
    %v1337 = vunpack.c.l.b16 %v1325
    %v1338 = vunpack.c.l.b16 %v1326
    %v1339 = vpack.c.b16 %v1336, %v1335
    %v1340 = vpack.c.b16 %v1338, %v1337
    %v1344 = vsel %vm66, %v1319, 0
    %v1347 = vsel %vm66, %v1320, 0
    %v1350 = vsel %vm66, %v1321, 0
    %v1353 = vsel %vm66, %v1322, 0
    %1355 = vmatprep.subr.bf16.mxu0 0
    %1356 = vmatpush1.bf16.msra.mxu0 %v1339
    %1357 = vmatprep.subr.bf16.mxu0 0
    %1358 = vmatpush1.bf16.msra.mxu0 %v1340
    %1359 = vmatprep.subr.bf16.mxu0 0
    %1360 = vmatpush1.bf16.msra.mxu0 0
    %1361 = vmatprep.subr.bf16.mxu0 0
    %1362 = vmatpush1.bf16.msra.mxu0 0
    %1363 = vmatprep.subr.bf16.mxu0 0
    %1364 = vmatpush1.bf16.msra.mxu0 0
    %1365 = vmatprep.subr.bf16.mxu0 0
    %1366 = vmatpush1.bf16.msra.mxu0 0
    %1367 = vmatprep.subr.bf16.mxu0 0
    %1368 = vmatpush1.bf16.msra.mxu0 0
    %1369 = vmatprep.subr.bf16.mxu0 0
    %1370 = vmatpush1.bf16.msra.mxu0 0
    %1371 = vmatprep.subr.bf16.mxu0 0
    %1372 = vmatpush1.bf16.msra.mxu0 0
    %1373 = vmatprep.subr.bf16.mxu0 0
    %1374 = vmatpush1.bf16.msra.mxu0 0
    %1375 = vmatprep.subr.bf16.mxu0 0
    %1376 = vmatpush1.bf16.msra.mxu0 0
    %1377 = vmatprep.subr.bf16.mxu0 0
    %1378 = vmatpush1.bf16.msra.mxu0 0
    %1379 = vmatprep.subr.bf16.mxu0 0
    %1380 = vmatpush1.bf16.msra.mxu0 0
    %1381 = vmatprep.subr.bf16.mxu0 0
    %1382 = vmatpush1.bf16.msra.mxu0 0
    %1383 = vmatprep.subr.bf16.mxu0 0
    %1384 = vmatpush1.bf16.msra.mxu0 0
    %1385 = vmatprep.subr.bf16.mxu0 0
    %1386 = vmatpush1.bf16.msra.mxu0 0
    %1387 = vmatprep.mubr.bf16.mxu0 0
    %1388 = vmatmul.mubr.bf16.gmra.mrb[0].mxu0 %v1344
    %v1389 = vpop.f32.mrb[0].mxu0
    %v1390 = vadd.f32 %v1330, %v1389
    %v1391 = vpop.f32.mrb[0].mxu0
    %v1392 = vpop.f32.mrb[0].mxu0
    %v1393 = vadd.f32 %v1330, %v1392
    %v1394 = vpop.f32.mrb[0].mxu0
    %1395 = vmatprep.mubr.bf16.mxu0 0
    %1396 = vmatmul.mubr.bf16.gmra.mrb[0].mxu0 %v1347
    %v1397 = vpop.f32.mrb[0].mxu0
    %v1398 = vadd.f32 %v1330, %v1397
    %v1399 = vpop.f32.mrb[0].mxu0
    %v1400 = vpop.f32.mrb[0].mxu0
    %v1401 = vadd.f32 %v1330, %v1400
    %v1402 = vpop.f32.mrb[0].mxu0
    %1403 = vmatprep.mubr.bf16.mxu0 0
    %1404 = vmatmul.mubr.bf16.gmra.mrb[0].mxu0 %v1350
    %v1405 = vpop.f32.mrb[0].mxu0
    %v1406 = vadd.f32 %v1330, %v1405
    %v1407 = vpop.f32.mrb[0].mxu0
    %v1408 = vpop.f32.mrb[0].mxu0
    %v1409 = vadd.f32 %v1330, %v1408
    %v1410 = vpop.f32.mrb[0].mxu0
    %1411 = vmatprep.mubr.bf16.mxu0 0
    %1412 = vmatmul.mubr.bf16.gmra.mrb[0].mxu0 %v1353
    %v1413 = vpop.f32.mrb[0].mxu0
    %v1414 = vadd.f32 %v1330, %v1413
    %v1415 = vpop.f32.mrb[0].mxu0
    %v1416 = vpop.f32.mrb[0].mxu0
    %v1417 = vadd.f32 %v1330, %v1416
    %v1418 = vpop.f32.mrb[0].mxu0
    %1419 = vdwg.mxu0
    %v1420 = vmax.f32 %v1390, 0.0
    %v1421 = vmax.f32 %v1393, 0.0
    %v1422 = vmax.f32 %v1398, 0.0
    %v1423 = vmax.f32 %v1401, 0.0
    %v1424 = vmax.f32 %v1406, 0.0
    %v1425 = vmax.f32 %v1409, 0.0
    %v1426 = vmax.f32 %v1414, 0.0
    %v1427 = vmax.f32 %v1417, 0.0
    %v1428 = vpack.c.bf16 %v1421, %v1420
    %v1429 = vpack.c.bf16 %v1423, %v1422
    %v1430 = vpack.c.bf16 %v1425, %v1424
    %v1431 = vpack.c.bf16 %v1427, %v1426
    %v1432 = vld [vmem:[%s4] sm:$0xf]
    %v1433 = vld [vmem:[%s4 + $0x4] sm:$0xf]
    %v1434 = vld [vmem:[%s4 + $0x8] sm:$0xf]
    %v1435 = vld [vmem:[%s4 + $0xc] sm:$0xf]
    %v1436 = vld [vmem:[%s4 + $0x10] sm:$0xf]
    %v1437 = vld [vmem:[%s4 + $0x14] sm:$0xf]
    %v1438 = vld [vmem:[%s4 + $0x18] sm:$0xf]
    %v1439 = vld [vmem:[%s4 + $0x1c] sm:$0xf]
    %v1440 = vld [vmem:[%s4 + $0x20] sm:$0xf]
    %v1441 = vld [vmem:[%s4 + $0x24] sm:$0xf]
    %v1442 = vld [vmem:[%s4 + $0x28] sm:$0xf]
    %v1443 = vld [vmem:[%s4 + $0x2c] sm:$0xf]
    %v1444 = vld [vmem:[%s4 + $0x30] sm:$0xf]
    %v1445 = vld [vmem:[%s4 + $0x34] sm:$0xf]
    %v1446 = vld [vmem:[%s4 + $0x38] sm:$0xf]
    %v1447 = vld [vmem:[%s4 + $0x3c] sm:$0xf]
    %v1448 = vlaneseq
    %v1449 = vshrl.u32 %v1448, 7
    %v1450 = vsub.s32 0, %v1449
    %v1451 = vrot.slane %v56, %v1450
    %v1468 = vunpack.c.l.b16 %v1432
    %v1469 = vunpack.c.l.b16 %v1433
    %v1470 = vunpack.c.l.b16 %v1434
    %v1471 = vunpack.c.l.b16 %v1435
    %v1472 = vunpack.c.l.b16 %v1436
    %v1473 = vunpack.c.l.b16 %v1437
    %v1474 = vunpack.c.l.b16 %v1438
    %v1475 = vunpack.c.l.b16 %v1439
    %v1476 = vunpack.c.l.b16 %v1440
    %v1477 = vunpack.c.l.b16 %v1441
    %v1478 = vunpack.c.l.b16 %v1442
    %v1479 = vunpack.c.l.b16 %v1443
    %v1480 = vunpack.c.l.b16 %v1444
    %v1481 = vunpack.c.l.b16 %v1445
    %v1482 = vunpack.c.l.b16 %v1446
    %v1483 = vunpack.c.l.b16 %v1447
    %v1484 = vpack.c.b16 %v1469, %v1468
    %v1485 = vpack.c.b16 %v1471, %v1470
    %v1486 = vpack.c.b16 %v1473, %v1472
    %v1487 = vpack.c.b16 %v1475, %v1474
    %v1488 = vpack.c.b16 %v1477, %v1476
    %v1489 = vpack.c.b16 %v1479, %v1478
    %v1490 = vpack.c.b16 %v1481, %v1480
    %v1491 = vpack.c.b16 %v1483, %v1482
    %1500 = vmatprep.subr.bf16.mxu0 0
    %1501 = vmatpush1.bf16.msra.mxu0 %v1484
    %1502 = vmatprep.subr.bf16.mxu0 0
    %1503 = vmatpush1.bf16.msra.mxu0 %v1485
    %1504 = vmatprep.subr.bf16.mxu0 0
    %1505 = vmatpush1.bf16.msra.mxu0 %v1486
    %1506 = vmatprep.subr.bf16.mxu0 0
    %1507 = vmatpush1.bf16.msra.mxu0 %v1487
    %1508 = vmatprep.subr.bf16.mxu0 0
    %1509 = vmatpush1.bf16.msra.mxu0 %v1488
    %1510 = vmatprep.subr.bf16.mxu0 0
    %1511 = vmatpush1.bf16.msra.mxu0 %v1489
    %1512 = vmatprep.subr.bf16.mxu0 0
    %1513 = vmatpush1.bf16.msra.mxu0 %v1490
    %1514 = vmatprep.subr.bf16.mxu0 0
    %1515 = vmatpush1.bf16.msra.mxu0 %v1491
    %1516 = vmatprep.subr.bf16.mxu0 0
    %1517 = vmatpush1.bf16.msra.mxu0 0
    %1518 = vmatprep.subr.bf16.mxu0 0
    %1519 = vmatpush1.bf16.msra.mxu0 0
    %1520 = vmatprep.subr.bf16.mxu0 0
    %1521 = vmatpush1.bf16.msra.mxu0 0
    %1522 = vmatprep.subr.bf16.mxu0 0
    %1523 = vmatpush1.bf16.msra.mxu0 0
    %1524 = vmatprep.subr.bf16.mxu0 0
    %1525 = vmatpush1.bf16.msra.mxu0 0
    %1526 = vmatprep.subr.bf16.mxu0 0
    %1527 = vmatpush1.bf16.msra.mxu0 0
    %1528 = vmatprep.subr.bf16.mxu0 0
    %1529 = vmatpush1.bf16.msra.mxu0 0
    %1530 = vmatprep.subr.bf16.mxu0 0
    %1531 = vmatpush1.bf16.msra.mxu0 0
    %1532 = vmatprep.mubr.bf16.mxu0 0
    %1533 = vmatmul.mubr.bf16.gmra.mrb[0].mxu0 %v1428
    %v1534 = vpop.f32.mrb[0].mxu0
    %v1535 = vadd.f32 %v1451, %v1534
    %v1536 = vpop.f32.mrb[0].mxu0
    %v1537 = vpop.f32.mrb[0].mxu0
    %v1538 = vadd.f32 %v1451, %v1537
    %v1539 = vpop.f32.mrb[0].mxu0
    %1540 = vmatprep.mubr.bf16.mxu0 0
    %1541 = vmatmul.mubr.bf16.gmra.mrb[0].mxu0 %v1429
    %v1542 = vpop.f32.mrb[0].mxu0
    %v1543 = vadd.f32 %v1451, %v1542
    %v1544 = vpop.f32.mrb[0].mxu0
    %v1545 = vpop.f32.mrb[0].mxu0
    %v1546 = vadd.f32 %v1451, %v1545
    %v1547 = vpop.f32.mrb[0].mxu0
    %1548 = vmatprep.mubr.bf16.mxu0 0
    %1549 = vmatmul.mubr.bf16.gmra.mrb[0].mxu0 %v1430
    %v1550 = vpop.f32.mrb[0].mxu0
    %v1551 = vadd.f32 %v1451, %v1550
    %v1552 = vpop.f32.mrb[0].mxu0
    %v1553 = vpop.f32.mrb[0].mxu0
    %v1554 = vadd.f32 %v1451, %v1553
    %v1555 = vpop.f32.mrb[0].mxu0
    %1556 = vmatprep.mubr.bf16.mxu0 0
    %1557 = vmatmul.mubr.bf16.gmra.mrb[0].mxu0 %v1431
    %v1558 = vpop.f32.mrb[0].mxu0
    %v1559 = vadd.f32 %v1451, %v1558
    %v1560 = vpop.f32.mrb[0].mxu0
    %v1561 = vpop.f32.mrb[0].mxu0
    %v1562 = vadd.f32 %v1451, %v1561
    %v1563 = vpop.f32.mrb[0].mxu0
    %1564 = vdwg.mxu0
    %v1565 = vadd.f32 %v1183, %v1535
    %v1566 = vadd.f32 %v1184, %v1538
    %v1567 = vadd.f32 %v1185, %v1543
    %v1568 = vadd.f32 %v1186, %v1546
    %v1569 = vadd.f32 %v1187, %v1551
    %v1570 = vadd.f32 %v1188, %v1554
    %v1571 = vadd.f32 %v1189, %v1559
    %v1572 = vadd.f32 %v1190, %v1562
    %v1573 = vsel %vm66, %v1565, 0.0
    %v1574 = vrot.slane %v1573, 4
    %v1575 = vadd.f32 %v1573, %v1574
    %v1576 = vrot.slane %v1575, 2
    %v1577 = vadd.f32 %v1575, %v1576
    %v1578 = vrot.slane %v1577, 1
    %v1579 = vadd.f32 %v1577, %v1578
    %v1580 = vsel %vm66, %v1566, 0.0
    %v1581 = vrot.slane %v1580, 4
    %v1582 = vadd.f32 %v1580, %v1581
    %v1583 = vrot.slane %v1582, 2
    %v1584 = vadd.f32 %v1582, %v1583
    %v1585 = vrot.slane %v1584, 1
    %v1586 = vadd.f32 %v1584, %v1585
    %v1587 = vsel %vm66, %v1567, 0.0
    %v1588 = vrot.slane %v1587, 4
    %v1589 = vadd.f32 %v1587, %v1588
    %v1590 = vrot.slane %v1589, 2
    %v1591 = vadd.f32 %v1589, %v1590
    %v1592 = vrot.slane %v1591, 1
    %v1593 = vadd.f32 %v1591, %v1592
    %v1594 = vsel %vm66, %v1568, 0.0
    %v1595 = vrot.slane %v1594, 4
    %v1596 = vadd.f32 %v1594, %v1595
    %v1597 = vrot.slane %v1596, 2
    %v1598 = vadd.f32 %v1596, %v1597
    %v1599 = vrot.slane %v1598, 1
    %v1600 = vadd.f32 %v1598, %v1599
    %v1601 = vsel %vm66, %v1569, 0.0
    %v1602 = vrot.slane %v1601, 4
    %v1603 = vadd.f32 %v1601, %v1602
    %v1604 = vrot.slane %v1603, 2
    %v1605 = vadd.f32 %v1603, %v1604
    %v1606 = vrot.slane %v1605, 1
    %v1607 = vadd.f32 %v1605, %v1606
    %v1608 = vsel %vm66, %v1570, 0.0
    %v1609 = vrot.slane %v1608, 4
    %v1610 = vadd.f32 %v1608, %v1609
    %v1611 = vrot.slane %v1610, 2
    %v1612 = vadd.f32 %v1610, %v1611
    %v1613 = vrot.slane %v1612, 1
    %v1614 = vadd.f32 %v1612, %v1613
    %v1615 = vsel %vm66, %v1571, 0.0
    %v1616 = vrot.slane %v1615, 4
    %v1617 = vadd.f32 %v1615, %v1616
    %v1618 = vrot.slane %v1617, 2
    %v1619 = vadd.f32 %v1617, %v1618
    %v1620 = vrot.slane %v1619, 1
    %v1621 = vadd.f32 %v1619, %v1620
    %v1622 = vsel %vm66, %v1572, 0.0
    %v1623 = vrot.slane %v1622, 4
    %v1624 = vadd.f32 %v1622, %v1623
    %v1625 = vrot.slane %v1624, 2
    %v1626 = vadd.f32 %v1624, %v1625
    %v1627 = vrot.slane %v1626, 1
    %v1628 = vadd.f32 %v1626, %v1627
    %v1629 = vrcp.pop 8.0
    %v1630 = vmul.f32 %v1579, %v1629
    %v1631 = vmul.f32 %v1586, %v1629
    %v1632 = vmul.f32 %v1593, %v1629
    %v1633 = vmul.f32 %v1600, %v1629
    %v1634 = vmul.f32 %v1607, %v1629
    %v1635 = vmul.f32 %v1614, %v1629
    %v1636 = vmul.f32 %v1621, %v1629
    %v1637 = vmul.f32 %v1628, %v1629
    %v1638 = vpack.c.bf16 %v1630, %v1630
    %v1639 = vpack.c.bf16 %v1631, %v1631
    %v1640 = vpack.c.bf16 %v1632, %v1632
    %v1641 = vpack.c.bf16 %v1633, %v1633
    %v1642 = vpack.c.bf16 %v1634, %v1634
    %v1643 = vpack.c.bf16 %v1635, %v1635
    %v1644 = vpack.c.bf16 %v1636, %v1636
    %v1645 = vpack.c.bf16 %v1637, %v1637
    %v1646 = vld [vmem:[%s5] sm:$0xf]
    %v1647 = vld [vmem:[%s5 + $0x4] sm:$0xf]
    %v1648 = vld [vmem:[%s5 + $0x8] sm:$0xf]
    %v1649 = vld [vmem:[%s5 + $0xc] sm:$0xf]
    %v1650 = vlaneseq
    %v1651 = vshrl.u32 %v1650, 7
    %v1652 = vsub.s32 0, %v1651
    %v1653 = vrot.slane %v57, %v1652
    %v1662 = vunpack.c.l.b16 %v1638
    %v1663 = vunpack.c.l.b16 %v1639
    %v1664 = vunpack.c.l.b16 %v1640
    %v1665 = vunpack.c.l.b16 %v1641
    %v1666 = vunpack.c.l.b16 %v1642
    %v1667 = vunpack.c.l.b16 %v1643
    %v1668 = vunpack.c.l.b16 %v1644
    %v1669 = vunpack.c.l.b16 %v1645
    %vm1670 = vcmask 1041409
    %v1671 = vsel %vm1670, %v1663, %v1662
    %vm1672 = vcmask 1042434
    %v1673 = vsel %vm1672, %v1664, %v1671
    %vm1674 = vcmask 1043459
    %v1675 = vsel %vm1674, %v1665, %v1673
    %vm1676 = vcmask 1044484
    %v1677 = vsel %vm1676, %v1666, %v1675
    %vm1678 = vcmask 1045509
    %v1679 = vsel %vm1678, %v1667, %v1677
    %vm1680 = vcmask 1046534
    %v1681 = vsel %vm1680, %v1668, %v1679
    %vm1682 = vcmask 1047559
    %v1683 = vsel %vm1682, %v1669, %v1681
    %v1684 = vpack.c.b16 %v1683, %v1683
    %v1689 = vunpack.c.l.b16 %v1646
    %v1690 = vunpack.c.l.b16 %v1647
    %v1691 = vunpack.c.l.b16 %v1648
    %v1692 = vunpack.c.l.b16 %v1649
    %v1693 = vpack.c.b16 %v1690, %v1689
    %v1694 = vpack.c.b16 %v1692, %v1691
    %v1698 = vsel %vm66, %v1684, 0
    %1700 = vmatprep.subr.bf16.mxu0 0
    %1701 = vmatpush1.bf16.msra.mxu0 %v1693
    %1702 = vmatprep.subr.bf16.mxu0 0
    %1703 = vmatpush1.bf16.msra.mxu0 %v1694
    %1704 = vmatprep.subr.bf16.mxu0 0
    %1705 = vmatpush1.bf16.msra.mxu0 0
    %1706 = vmatprep.subr.bf16.mxu0 0
    %1707 = vmatpush1.bf16.msra.mxu0 0
    %1708 = vmatprep.subr.bf16.mxu0 0
    %1709 = vmatpush1.bf16.msra.mxu0 0
    %1710 = vmatprep.subr.bf16.mxu0 0
    %1711 = vmatpush1.bf16.msra.mxu0 0
    %1712 = vmatprep.subr.bf16.mxu0 0
    %1713 = vmatpush1.bf16.msra.mxu0 0
    %1714 = vmatprep.subr.bf16.mxu0 0
    %1715 = vmatpush1.bf16.msra.mxu0 0
    %1716 = vmatprep.subr.bf16.mxu0 0
    %1717 = vmatpush1.bf16.msra.mxu0 0
    %1718 = vmatprep.subr.bf16.mxu0 0
    %1719 = vmatpush1.bf16.msra.mxu0 0
    %1720 = vmatprep.subr.bf16.mxu0 0
    %1721 = vmatpush1.bf16.msra.mxu0 0
    %1722 = vmatprep.subr.bf16.mxu0 0
    %1723 = vmatpush1.bf16.msra.mxu0 0
    %1724 = vmatprep.subr.bf16.mxu0 0
    %1725 = vmatpush1.bf16.msra.mxu0 0
    %1726 = vmatprep.subr.bf16.mxu0 0
    %1727 = vmatpush1.bf16.msra.mxu0 0
    %1728 = vmatprep.subr.bf16.mxu0 0
    %1729 = vmatpush1.bf16.msra.mxu0 0
    %1730 = vmatprep.subr.bf16.mxu0 0
    %1731 = vmatpush1.bf16.msra.mxu0 0
    %1732 = vmatprep.mubr.bf16.mxu0 0
    %1733 = vmatmul.mubr.bf16.gmra.mrb[0].mxu0 %v1698
    %v1734 = vpop.f32.mrb[0].mxu0
    %v1735 = vadd.f32 %v1653, %v1734
    %v1736 = vpop.f32.mrb[0].mxu0
    %v1737 = vpop.f32.mrb[0].mxu0
    %v1738 = vpop.f32.mrb[0].mxu0
    %1739 = vdwg.mxu0
    %1740 = vst [vmem:[#allocation7] sm:$0xff] %v1735
    // Predicated region
    $region34: #{tpu_custom_call.1} parent=1 // pred_check
      _
    $region35: #{tpu_custom_call.1} parent=1 // pred_check_branch
      %1742 = sbr.rel (0) target = $region37
    $region36: #{tpu_custom_call.1} parent=1 // pred_region
      %s1744 = ssub.s32 128, 128
      %1745 = vsyncadd [#allocation4], %s1744
      %s1747 = sshll.u32 [#allocation7], 4
      %s1748 = int_to_ptr.vmem [resolvable:$true] %s1747
      %1750 = dma.vmem_to_hbm [thread:$0]  %s1748, 128, %s6, [#allocation4]
    $region37: #{tpu_custom_call.1} parent=1 // pred_fallthru
      _
    // Predicated region
    $region38: #{tpu_custom_call.1} parent=1 // pred_check
      _
    $region39: #{tpu_custom_call.1} parent=1 // pred_check_branch
      %1752 = sbr.rel (0) target = $region41
    $region40: #{tpu_custom_call.1} parent=1 // pred_region
      %1753 = dma.done [#allocation4], 128
    $region41: #{tpu_custom_call.1} parent=1 // pred_fallthru
      _
    %1754 = vsyncpa [#allocation3], 1
    %1755 = vsyncpa [#allocation6], 1
    %1756 = vsyncpa [#allocation4], 1

</llo_original>
